<compile_context>
chip_gen: v7x
topology: tpu7x:2x2x1
jax: 0.10.0
libtpu: 0.0.40
codegen_flags: <defaults>
</compile_context>

<pallas_src>
import functools

import jax
import jax.numpy as jnp
from jax.experimental import pallas as pl
from jax.experimental.pallas import tpu as pltpu


def _round_up(x: int, m: int) -> int:
    return ((x + m - 1) // m) * m


def _vmem_budget_bytes() -> int:
    """Generation-aware VMEM budget (~82% of per-core capacity, leaving Mosaic headroom)."""
    try:
        cap = pltpu.get_tpu_info().vmem_capacity_bytes
    except Exception:
        cap = 64 * 1024 * 1024  # conservative fallback (v7x per-TC capacity)
    return int(cap * 0.82)


# ---------------------------------------------------------------------------- kernels


def _layernorm_f32(x, gamma, beta, d_real):
    """LayerNorm over the last dim in f32; statistics masked to the real (unpadded) D."""
    d_pad = x.shape[-1]
    if d_pad != d_real:
        lane = jax.lax.broadcasted_iota(jnp.int32, x.shape, dimension=1)
        mask = lane < d_real
        x = jnp.where(mask, x, 0.0)
        mean = jnp.sum(x, axis=-1, keepdims=True) * (1.0 / d_real)
        xc = jnp.where(mask, x - mean, 0.0)
        var = jnp.sum(xc * xc, axis=-1, keepdims=True) * (1.0 / d_real)
    else:
        mean = jnp.mean(x, axis=-1, keepdims=True)
        xc = x - mean
        var = jnp.mean(xc * xc, axis=-1, keepdims=True)
    inv = jax.lax.rsqrt(var + 1e-5)  # torch.nn.LayerNorm default eps
    return xc * inv * gamma + beta


def _gelu_exact(h):
    # Exact erf-based GELU keeps parity with torch.nn.GELU(); tanh-approx would ride the
    # EUP slot instead of the VALU if parity requirements relax.
    return 0.5 * h * (1.0 + jax.lax.erf(h * 0.7071067811865475))


def _ffn_kernel_resident(x_ref, gamma_ref, beta_ref, w1_ref, b1_ref, w2_ref, b2_ref,
                         o_ref, *, d_real):
    """Full weights resident in VMEM; one grid axis over row tiles."""
    x = x_ref[...].astype(jnp.float32)
    xn = _layernorm_f32(x, gamma_ref[...].astype(jnp.float32),
                        beta_ref[...].astype(jnp.float32), d_real)
    # bf16 operands, f32 accumulation on the MXU.
    h = jnp.dot(xn.astype(w1_ref.dtype), w1_ref[...], preferred_element_type=jnp.float32)
    h = _gelu_exact(h + b1_ref[...].astype(jnp.float32))
    y = jnp.dot(h.astype(w2_ref.dtype), w2_ref[...], preferred_element_type=jnp.float32)
    o_ref[...] = (y + b2_ref[...].astype(jnp.float32)).astype(o_ref.dtype)


def _ffn_kernel_hchunk(x_ref, gamma_ref, beta_ref, w1_ref, b1_ref, w2_ref, b2_ref,
                       o_ref, xn_ref, acc_ref, *, d_real):
    """Hidden dim streamed in chunks (inner 'arbitrary' grid axis); weights never need to
    be fully resident (v7x-scale models)."""
    hc = pl.program_id(1)

    @pl.when(hc == 0)
    def _():
        x = x_ref[...].astype(jnp.float32)
        xn = _layernorm_f32(x, gamma_ref[...].astype(jnp.float32),
                            beta_ref[...].astype(jnp.float32), d_real)
        xn_ref[...] = xn.astype(xn_ref.dtype)          # cache normalized rows (bf16)
        acc_ref[...] = jnp.zeros_like(acc_ref)

    h = jnp.dot(xn_ref[...], w1_ref[...], preferred_element_type=jnp.float32)
    h = _gelu_exact(h + b1_ref[...].astype(jnp.float32))
    acc_ref[...] += jnp.dot(h.astype(w2_ref.dtype), w2_ref[...],
                            preferred_element_type=jnp.float32)

    @pl.when(hc == pl.num_programs(1) - 1)
    def _():
        o_ref[...] = (acc_ref[...] + b2_ref[...].astype(jnp.float32)).astype(o_ref.dtype)


# -------------------------------------------------------------------------- tile picker

_ROW_TILE_FLOOR = 256  # MXU M-dimension floor (2x256 MXU on v6e/v7x; generous on v5e)


def _pick_tiles(rows, d_p, h_full, x_bytes, mm_bytes, budget):
    """Return (row_tile, h_chunk_or_None) fitting the per-core VMEM budget."""

    def param_bytes(th):
        # Default BlockSpec pipelining allocates two buffers even for grid-invariant
        # blocks (re-DMA is skipped, the second buffer is not).
        return 2 * (2 * d_p * th * mm_bytes + (th + 3 * d_p) * 4)

    def act_bytes(tm, th, chunked):
        io = 2 * 2 * tm * d_p * x_bytes            # in + out tiles, double-buffered
        inter = tm * th * 4 + tm * d_p * 4         # f32 hidden + f32 xn/acc
        if chunked:
            inter += tm * d_p * mm_bytes           # cached bf16 xn scratch
        return io + inter

    cap = max(_ROW_TILE_FLOOR, _round_up(rows, 8))  # pad tiny inputs up to the floor only
    row_cands = []
    for t in (512, 256, 128, 64, 32, 16, 8):
        t = min(t, cap)
        if t not in row_cands:
            row_cands.append(t)

    h_p0 = _round_up(h_full, 128)
    # 1) Preferred: fully resident weights (zero weight re-DMA across the whole grid).
    for tm in row_cands:
        if param_bytes(h_p0) + act_bytes(tm, h_p0, False) <= budget:
            return tm, None
    # 2) Stream the hidden dimension (v7x-scale weights).
    for tm in row_cands:
        for th in (4096, 2048, 1024, 512, 256, 128):
            if th > h_p0:
                continue
            if param_bytes(th) + act_bytes(tm, th, True) <= budget:
                return tm, th
    return 8, 128


# ----------------------------------------------------------------------------- wrapper


def feed_forward(x, gamma, beta, w1, b1, w2, b2, *,
                 matmul_dtype=jnp.bfloat16, row_tile=None, h_chunk=None):
    """x: (B, N, D) -> (B, N, D).  Fused LayerNorm + Linear + GELU + Linear."""
    B, N, D = x.shape
    H = w1.shape[1]
    rows = B * N
    mm_dtype = jnp.dtype(matmul_dtype)

    budget = _vmem_budget_bytes()
    d_p = _round_up(D, 128)

    tm_auto, th_auto = _pick_tiles(rows, d_p, H, jnp.dtype(x.dtype).itemsize,
                                   mm_dtype.itemsize, budget)
    tm = row_tile if row_tile is not None else tm_auto
    th = h_chunk if h_chunk is not None else th_auto

    if th is not None:
        th = _round_up(min(th, _round_up(H, 128)), 128)
        h_p = _round_up(H, th)          # hidden padded to a chunk multiple
    else:
        h_p = _round_up(H, 128)

    rows_p = _round_up(rows, tm)

    # --- wrapper-side padding (lane-dense last dims) and bf16 weight casts ---
    x2 = jnp.pad(x.reshape(rows, D), ((0, rows_p - rows), (0, d_p - D)))
    gamma2 = jnp.pad(gamma.astype(jnp.float32), (0, d_p - D)).reshape(1, d_p)
    beta2 = jnp.pad(beta.astype(jnp.float32), (0, d_p - D)).reshape(1, d_p)
    w1p = jnp.pad(w1.astype(mm_dtype), ((0, d_p - D), (0, h_p - H)))
    b1p = jnp.pad(b1.astype(jnp.float32), (0, h_p - H)).reshape(1, h_p)
    w2p = jnp.pad(w2.astype(mm_dtype), ((0, h_p - H), (0, d_p - D)))
    b2p = jnp.pad(b2.astype(jnp.float32), (0, d_p - D)).reshape(1, d_p)

    cost = pl.CostEstimate(
        flops=4 * rows_p * d_p * h_p + 10 * rows_p * d_p,
        transcendentals=rows_p * h_p,
        bytes_accessed=(2 * rows_p * d_p * jnp.dtype(x.dtype).itemsize
                        + 2 * d_p * h_p * mm_dtype.itemsize + (h_p + 3 * d_p) * 4),
    )

    if th is None:
        kernel = functools.partial(_ffn_kernel_resident, d_real=D)
        grid_spec = pltpu.PrefetchScalarGridSpec(
            num_scalar_prefetch=0,
            grid=(rows_p // tm,),
            in_specs=[
                pl.BlockSpec((tm, d_p), lambda i: (i, 0)),    # x row tile
                pl.BlockSpec((1, d_p), lambda i: (0, 0)),     # gamma
                pl.BlockSpec((1, d_p), lambda i: (0, 0)),     # beta
                pl.BlockSpec((d_p, h_p), lambda i: (0, 0)),   # w1
                pl.BlockSpec((1, h_p), lambda i: (0, 0)),     # b1
                pl.BlockSpec((h_p, d_p), lambda i: (0, 0)),   # w2
                pl.BlockSpec((1, d_p), lambda i: (0, 0)),     # b2
            ],
            out_specs=pl.BlockSpec((tm, d_p), lambda i: (i, 0)),
        )
        semantics = ("parallel",)
    else:
        kernel = functools.partial(_ffn_kernel_hchunk, d_real=D)
        grid_spec = pltpu.PrefetchScalarGridSpec(
            num_scalar_prefetch=0,
            grid=(rows_p // tm, h_p // th),
            in_specs=[
                pl.BlockSpec((tm, d_p), lambda i, h: (i, 0)),   # x row tile
                pl.BlockSpec((1, d_p), lambda i, h: (0, 0)),    # gamma
                pl.BlockSpec((1, d_p), lambda i, h: (0, 0)),    # beta
                pl.BlockSpec((d_p, th), lambda i, h: (0, h)),   # w1 H-chunk
                pl.BlockSpec((1, th), lambda i, h: (0, h)),     # b1 H-chunk
                pl.BlockSpec((th, d_p), lambda i, h: (h, 0)),   # w2 H-chunk
                pl.BlockSpec((1, d_p), lambda i, h: (0, 0)),    # b2
            ],
            out_specs=pl.BlockSpec((tm, d_p), lambda i, h: (i, 0)),
            scratch_shapes=[pltpu.VMEM((tm, d_p), mm_dtype),      # cached xn (bf16)
                            pltpu.VMEM((tm, d_p), jnp.float32)],  # f32 output accumulator
        )
        semantics = ("parallel", "arbitrary")

    out = pl.pallas_call(
        kernel,
        out_shape=jax.ShapeDtypeStruct((rows_p, d_p), x.dtype),
        grid_spec=grid_spec,
        compiler_params=pltpu.CompilerParams(
            dimension_semantics=semantics,
            vmem_limit_bytes=budget,
        ),
        cost_estimate=cost,
    )(x2, gamma2, beta2, w1p, b1p, w2p, b2p)

    return out[:rows, :D].reshape(B, N, D)


# --------------------------------------------------------------------------- reference


def _reference(x, gamma, beta, w1, b1, w2, b2, matmul_dtype=jnp.bfloat16):
    """Mirrors the kernel's dtype handling (bf16 matmul operands, f32 accumulation).
    Versus a pure-f32 torch reference the only deviation is bf16 operand quantization."""
    xf = x.astype(jnp.float32)
    mean = jnp.mean(xf, axis=-1, keepdims=True)
    var = jnp.mean((xf - mean) ** 2, axis=-1, keepdims=True)
    xn = (xf - mean) * jax.lax.rsqrt(var + 1e-5) * gamma + beta
    h = jnp.dot(xn.astype(matmul_dtype), w1.astype(matmul_dtype),
                preferred_element_type=jnp.float32) + b1
    h = jax.nn.gelu(h, approximate=False)
    y = jnp.dot(h.astype(matmul_dtype), w2.astype(matmul_dtype),
                preferred_element_type=jnp.float32) + b2
    return y.astype(x.dtype)


if __name__ == "__main__":
    key = jax.random.PRNGKey(0)
    # size_batch, num_patch, dim, hidden_dim — N=7 exercises row padding, D=128 / H=256
    # keep all blocks lane-dense.
    B, N, D, H = 2, 7, 128, 256

    k_x, k_g, k_b, k_w1, k_b1, k_w2, k_b2 = jax.random.split(key, 7)
    x = jax.random.normal(k_x, (B, N, D), dtype=jnp.float32)

    # nn.LayerNorm(D), nn.Linear(D, H), nn.Linear(H, D) parameter shapes.
    gamma = 1.0 + 0.1 * jax.random.normal(k_g, (D,), dtype=jnp.float32)
    beta = 0.1 * jax.random.normal(k_b, (D,), dtype=jnp.float32)
    w1 = jax.random.normal(k_w1, (D, H), dtype=jnp.float32) * (1.0 / jnp.sqrt(D))
    b1 = 0.05 * jax.random.normal(k_b1, (H,), dtype=jnp.float32)
    w2 = jax.random.normal(k_w2, (H, D), dtype=jnp.float32) * (1.0 / jnp.sqrt(H))
    b2 = 0.05 * jax.random.normal(k_b2, (D,), dtype=jnp.float32)

    y_ref = _reference(x, gamma, beta, w1, b1, w2, b2)

    # Path 1: fully resident weights (auto-picked tiles).
    y = feed_forward(x, gamma, beta, w1, b1, w2, b2)
    y = jax.block_until_ready(y)
    assert jnp.allclose(y, y_ref, atol=5e-3, rtol=5e-3), "resident path mismatch"

    # Path 2: force the H-streamed (v7x-scale) accumulator path to validate it as well.
    y2 = feed_forward(x, gamma, beta, w1, b1, w2, b2, row_tile=128, h_chunk=128)
    y2 = jax.block_until_ready(y2)
    assert jnp.allclose(y2, y_ref, atol=5e-3, rtol=5e-3), "H-chunked path mismatch"

    print("KERNEL_OK")
</pallas_src>

<mosaic_0001>
module attributes {stable_mosaic.version = 11 : i64} {
  func.func @_ffn_kernel_resident(%arg0: i32, %arg1: memref<256x128xf32, #tpu.memory_space<vmem>>, %arg2: memref<1x128xf32, #tpu.memory_space<vmem>>, %arg3: memref<1x128xf32, #tpu.memory_space<vmem>>, %arg4: memref<128x256xbf16, #tpu.memory_space<vmem>>, %arg5: memref<1x256xf32, #tpu.memory_space<vmem>>, %arg6: memref<256x128xbf16, #tpu.memory_space<vmem>>, %arg7: memref<1x128xf32, #tpu.memory_space<vmem>>, %arg8: memref<256x128xf32, #tpu.memory_space<vmem>>) attributes {dimension_semantics = [#tpu.dimension_semantics<parallel>], iteration_bounds = array<i64: 1>, scalar_prefetch = 0 : i64, scratch_operands = 0 : i64, tpu.core_type = #tpu.core_type<tc>, window_params = [{transform_indices = @transform_0, window_bounds = array<i64: 256, 128>}, {pipeline_mode = #tpu.pipeline_mode<synchronous>, transform_indices = @transform_1, window_bounds = array<i64: 1, 128>}, {pipeline_mode = #tpu.pipeline_mode<synchronous>, transform_indices = @transform_2, window_bounds = array<i64: 1, 128>}, {pipeline_mode = #tpu.pipeline_mode<synchronous>, transform_indices = @transform_3, window_bounds = array<i64: 128, 256>}, {pipeline_mode = #tpu.pipeline_mode<synchronous>, transform_indices = @transform_4, window_bounds = array<i64: 1, 256>}, {pipeline_mode = #tpu.pipeline_mode<synchronous>, transform_indices = @transform_5, window_bounds = array<i64: 256, 128>}, {pipeline_mode = #tpu.pipeline_mode<synchronous>, transform_indices = @transform_6, window_bounds = array<i64: 1, 128>}, {transform_indices = @transform_7, window_bounds = array<i64: 256, 128>}]} {
    %c0 = arith.constant 0 : index
    %c0_0 = arith.constant 0 : index
    %0 = vector.load %arg1[%c0, %c0_0] : memref<256x128xf32, #tpu.memory_space<vmem>>, vector<256x128xf32>
    %c0_1 = arith.constant 0 : index
    %c0_2 = arith.constant 0 : index
    %1 = vector.load %arg2[%c0_1, %c0_2] : memref<1x128xf32, #tpu.memory_space<vmem>>, vector<1x128xf32>
    %c0_3 = arith.constant 0 : index
    %c0_4 = arith.constant 0 : index
    %2 = vector.load %arg3[%c0_3, %c0_4] : memref<1x128xf32, #tpu.memory_space<vmem>>, vector<1x128xf32>
    %cst = arith.constant dense<0.000000e+00> : vector<256xf32>
    %3 = vector.multi_reduction <add>, %0, %cst [1] : vector<256x128xf32> to vector<256xf32>
    %4 = vector.shape_cast %3 : vector<256xf32> to vector<256x1xf32>
    %cst_5 = arith.constant 1.280000e+02 : f32
    %5 = vector.broadcast %cst_5 : f32 to vector<256x1xf32>
    %6 = arith.divf %4, %5 : vector<256x1xf32>
    %7 = vector.broadcast %6 : vector<256x1xf32> to vector<256x128xf32>
    %8 = arith.subf %0, %7 : vector<256x128xf32>
    %9 = arith.mulf %8, %8 : vector<256x128xf32>
    %cst_6 = arith.constant dense<0.000000e+00> : vector<256xf32>
    %10 = vector.multi_reduction <add>, %9, %cst_6 [1] : vector<256x128xf32> to vector<256xf32>
    %11 = vector.shape_cast %10 : vector<256xf32> to vector<256x1xf32>
    %cst_7 = arith.constant 1.280000e+02 : f32
    %12 = vector.broadcast %cst_7 : f32 to vector<256x1xf32>
    %13 = arith.divf %11, %12 : vector<256x1xf32>
    %cst_8 = arith.constant 9.99999974E-6 : f32
    %14 = vector.broadcast %cst_8 : f32 to vector<256x1xf32>
    %15 = arith.addf %13, %14 : vector<256x1xf32>
    %16 = math.rsqrt %15 : vector<256x1xf32>
    %17 = vector.broadcast %16 : vector<256x1xf32> to vector<256x128xf32>
    %18 = arith.mulf %8, %17 : vector<256x128xf32>
    %19 = vector.broadcast %1 : vector<1x128xf32> to vector<256x128xf32>
    %20 = arith.mulf %18, %19 : vector<256x128xf32>
    %21 = vector.broadcast %2 : vector<1x128xf32> to vector<256x128xf32>
    %22 = arith.addf %20, %21 : vector<256x128xf32>
    %23 = arith.truncf %22 : vector<256x128xf32> to vector<256x128xbf16>
    %c0_9 = arith.constant 0 : index
    %c0_10 = arith.constant 0 : index
    %24 = vector.load %arg4[%c0_9, %c0_10] : memref<128x256xbf16, #tpu.memory_space<vmem>>, vector<128x256xbf16>
    %cst_11 = arith.constant dense<0.000000e+00> : vector<256x256xf32>
    %25 = tpu.matmul %23, %24, %cst_11 {dimension_numbers = #tpu.dot_dimension_numbers<[1], [0], [0], [1], [0, 0, 1, 1], [], []>} : vector<256x128xbf16>, vector<128x256xbf16>, vector<256x256xf32> -> vector<256x256xf32>
    %c0_12 = arith.constant 0 : index
    %c0_13 = arith.constant 0 : index
    %26 = vector.load %arg5[%c0_12, %c0_13] : memref<1x256xf32, #tpu.memory_space<vmem>>, vector<1x256xf32>
    %27 = vector.broadcast %26 : vector<1x256xf32> to vector<256x256xf32>
    %28 = arith.addf %25, %27 : vector<256x256xf32>
    %cst_14 = arith.constant 5.000000e-01 : f32
    %29 = vector.broadcast %cst_14 : f32 to vector<256x256xf32>
    %30 = arith.mulf %29, %28 : vector<256x256xf32>
    %cst_15 = arith.constant 0.707106769 : f32
    %31 = vector.broadcast %cst_15 : f32 to vector<256x256xf32>
    %32 = arith.mulf %28, %31 : vector<256x256xf32>
    %33 = math.erf %32 : vector<256x256xf32>
    %cst_16 = arith.constant 1.000000e+00 : f32
    %34 = vector.broadcast %cst_16 : f32 to vector<256x256xf32>
    %35 = arith.addf %34, %33 : vector<256x256xf32>
    %36 = arith.mulf %30, %35 : vector<256x256xf32>
    %37 = arith.truncf %36 : vector<256x256xf32> to vector<256x256xbf16>
    %c0_17 = arith.constant 0 : index
    %c0_18 = arith.constant 0 : index
    %38 = vector.load %arg6[%c0_17, %c0_18] : memref<256x128xbf16, #tpu.memory_space<vmem>>, vector<256x128xbf16>
    %cst_19 = arith.constant dense<0.000000e+00> : vector<256x128xf32>
    %39 = tpu.matmul %37, %38, %cst_19 {dimension_numbers = #tpu.dot_dimension_numbers<[1], [0], [0], [1], [0, 0, 1, 1], [], []>} : vector<256x256xbf16>, vector<256x128xbf16>, vector<256x128xf32> -> vector<256x128xf32>
    %c0_20 = arith.constant 0 : index
    %c0_21 = arith.constant 0 : index
    %40 = vector.load %arg7[%c0_20, %c0_21] : memref<1x128xf32, #tpu.memory_space<vmem>>, vector<1x128xf32>
    %41 = vector.broadcast %40 : vector<1x128xf32> to vector<256x128xf32>
    %42 = arith.addf %39, %41 : vector<256x128xf32>
    %c0_22 = arith.constant 0 : index
    %c0_23 = arith.constant 0 : index
    %43 = vector.load %arg8[%c0_22, %c0_23] : memref<256x128xf32, #tpu.memory_space<vmem>>, vector<256x128xf32>
    tpu.vector_store %arg8[%c0_22, %c0_23], %42 {strides = array<i32>} : memref<256x128xf32, #tpu.memory_space<vmem>>, vector<256x128xf32>,
    return
  }
  func.func @transform_0(%arg0: i32) -> (i32, i32) {
    %c0_i32 = arith.constant 0 : i32
    %c0_i32_0 = arith.constant 0 : i32
    return %arg0, %c0_i32 : i32, i32
  }
  func.func @transform_1(%arg0: i32) -> (i32, i32) {
    %c0_i32 = arith.constant 0 : i32
    %c0_i32_0 = arith.constant 0 : i32
    %c0_i32_1 = arith.constant 0 : i32
    return %c0_i32, %c0_i32_0 : i32, i32
  }
  func.func @transform_2(%arg0: i32) -> (i32, i32) {
    %c0_i32 = arith.constant 0 : i32
    %c0_i32_0 = arith.constant 0 : i32
    %c0_i32_1 = arith.constant 0 : i32
    return %c0_i32, %c0_i32_0 : i32, i32
  }
  func.func @transform_3(%arg0: i32) -> (i32, i32) {
    %c0_i32 = arith.constant 0 : i32
    %c0_i32_0 = arith.constant 0 : i32
    %c0_i32_1 = arith.constant 0 : i32
    return %c0_i32, %c0_i32_0 : i32, i32
  }
  func.func @transform_4(%arg0: i32) -> (i32, i32) {
    %c0_i32 = arith.constant 0 : i32
    %c0_i32_0 = arith.constant 0 : i32
    %c0_i32_1 = arith.constant 0 : i32
    return %c0_i32, %c0_i32_0 : i32, i32
  }
  func.func @transform_5(%arg0: i32) -> (i32, i32) {
    %c0_i32 = arith.constant 0 : i32
    %c0_i32_0 = arith.constant 0 : i32
    %c0_i32_1 = arith.constant 0 : i32
    return %c0_i32, %c0_i32_0 : i32, i32
  }
  func.func @transform_6(%arg0: i32) -> (i32, i32) {
    %c0_i32 = arith.constant 0 : i32
    %c0_i32_0 = arith.constant 0 : i32
    %c0_i32_1 = arith.constant 0 : i32
    return %c0_i32, %c0_i32_0 : i32, i32
  }
  func.func @transform_7(%arg0: i32) -> (i32, i32) {
    %c0_i32 = arith.constant 0 : i32
    %c0_i32_0 = arith.constant 0 : i32
    return %arg0, %c0_i32 : i32, i32
  }
}

</mosaic_0001>

<llo_original>
// kernel: tpu_custom_call.1
$region0: #{tpu_custom_call.1}
  #allocation0 [shape = 'u32[]', space=smem, size = 0x4, offset = 0x4, fixed_abs, tag = 'smem constant byte address 0x4 - core index']
  #allocation1 [shape = 'u32[144,128]{1,0:T(1,128)}', space=vmem, size = 0x12000, scoped, tag = 'internal scratch']
  %s0 = inlined_call_operand.hbm [shape: f32[256,128], index: 0, kind: input, shape index: {}]
  %s1 = inlined_call_operand.vmem [shape: f32[1,128], index: 1, kind: input, shape index: {}]
  %s2 = inlined_call_operand.vmem [shape: f32[1,128], index: 2, kind: input, shape index: {}]
  %s3 = inlined_call_operand.hbm [shape: bf16[128,256], index: 3, kind: input, shape index: {}]
  %s4 = inlined_call_operand.vmem [shape: f32[1,256], index: 4, kind: input, shape index: {}]
  %s5 = inlined_call_operand.hbm [shape: bf16[256,128], index: 5, kind: input, shape index: {}]
  %s6 = inlined_call_operand.vmem [shape: f32[1,128], index: 6, kind: input, shape index: {}]
  %s7 = inlined_call_operand.hbm [shape: f32[256,128], index: 7, kind: output, shape index: {}]
  %s8 = sld [smem:[#allocation0]]
  $region50: #{tpu_custom_call.1} parent=0
    _
  %s10 = ssub.s32 1, %s8
  %s11 = scalar_select 0, %s10, %s8
  $region1: #{tpu_custom_call.1} parent=0
    #allocation2 [shape = 'u8[131072]{0}', space=vmem, size = 0x20000, scoped, tag = 'input window, operand 0, single buffered']
    #allocation3 [shape = 's32[1]{0}', space=sflag, size = 0x4, scoped, tag = 'scoped memory for tpu_custom_call.1']
    #allocation4 [shape = 's32[1]{0}', space=sflag, size = 0x4, scoped, tag = 'scoped memory for tpu_custom_call.1']
    #allocation5 [shape = 'u8[65536]{0}', space=vmem, size = 0x10000, scoped, tag = 'input window, operand 3, single buffered']
    #allocation6 [shape = 's32[1]{0}', space=sflag, size = 0x4, scoped, tag = 'scoped memory for tpu_custom_call.1']
    #allocation7 [shape = 'u8[65536]{0}', space=vmem, size = 0x10000, scoped, tag = 'input window, operand 5, single buffered']
    #allocation8 [shape = 'u8[131072]{0}', space=vmem, size = 0x20000, scoped, tag = 'output window, operand 0, single buffered']
    %12 = vsyncpa [#allocation3], 0
    %13 = vsyncpa [#allocation6], 0
    %14 = vsyncpa [#allocation4], 0
    // Predicated region
    $region2: #{tpu_custom_call.1} parent=1 // pred_check
      _
    $region3: #{tpu_custom_call.1} parent=1 // pred_check_branch
      %16 = sbr.rel (0) target = $region5
    $region4: #{tpu_custom_call.1} parent=1 // pred_region
      %s18 = ssub.s32 4096, 4096
      %19 = vsyncadd [#allocation3], %s18
      %s20 = sshll.u32 [#allocation2], 4
      %s21 = int_to_ptr.vmem [resolvable:$true] %s20
      %26 = dma.hbm_to_vmem [thread:$0]  %s0, 4096, %s21, [#allocation3], 128, 128, 8
    $region5: #{tpu_custom_call.1} parent=1 // pred_fallthru
      _
    // Predicated region
    $region6: #{tpu_custom_call.1} parent=1 // pred_check
      _
    $region7: #{tpu_custom_call.1} parent=1 // pred_check_branch
      %28 = sbr.rel (0) target = $region9
    $region8: #{tpu_custom_call.1} parent=1 // pred_region
      _
    $region9: #{tpu_custom_call.1} parent=1 // pred_fallthru
      _
    // Predicated region
    $region10: #{tpu_custom_call.1} parent=1 // pred_check
      _
    $region11: #{tpu_custom_call.1} parent=1 // pred_check_branch
      %30 = sbr.rel (0) target = $region13
    $region12: #{tpu_custom_call.1} parent=1 // pred_region
      _
    $region13: #{tpu_custom_call.1} parent=1 // pred_fallthru
      _
    // Predicated region
    $region14: #{tpu_custom_call.1} parent=1 // pred_check
      _
    $region15: #{tpu_custom_call.1} parent=1 // pred_check_branch
      %32 = sbr.rel (0) target = $region17
    $region16: #{tpu_custom_call.1} parent=1 // pred_region
      %s34 = ssub.s32 2048, 2048
      %35 = vsyncadd [#allocation6], %s34
      %s36 = sshll.u32 [#allocation5], 4
      %s37 = int_to_ptr.vmem [resolvable:$true] %s36
      %42 = dma.hbm_to_vmem [thread:$0]  %s3, 2048, %s37, [#allocation6], 128, 128, 8
    $region17: #{tpu_custom_call.1} parent=1 // pred_fallthru
      _
    // Predicated region
    $region18: #{tpu_custom_call.1} parent=1 // pred_check
      _
    $region19: #{tpu_custom_call.1} parent=1 // pred_check_branch
      %44 = sbr.rel (0) target = $region21
    $region20: #{tpu_custom_call.1} parent=1 // pred_region
      _
    $region21: #{tpu_custom_call.1} parent=1 // pred_fallthru
      _
    // Predicated region
    $region22: #{tpu_custom_call.1} parent=1 // pred_check
      _
    $region23: #{tpu_custom_call.1} parent=1 // pred_check_branch
      %46 = sbr.rel (0) target = $region25
    $region24: #{tpu_custom_call.1} parent=1 // pred_region
      %s48 = ssub.s32 2048, 2048
      %49 = vsyncadd [#allocation6], %s48
      %s50 = sshll.u32 [#allocation7], 4
      %s51 = int_to_ptr.vmem [resolvable:$true] %s50
      %56 = dma.hbm_to_vmem [thread:$0]  %s5, 2048, %s51, [#allocation6], 64, 64, 4
    $region25: #{tpu_custom_call.1} parent=1 // pred_fallthru
      _
    // Predicated region
    $region26: #{tpu_custom_call.1} parent=1 // pred_check
      _
    $region27: #{tpu_custom_call.1} parent=1 // pred_check_branch
      %58 = sbr.rel (0) target = $region29
    $region28: #{tpu_custom_call.1} parent=1 // pred_region
      _
    $region29: #{tpu_custom_call.1} parent=1 // pred_fallthru
      _
    // Predicated region
    $region30: #{tpu_custom_call.1} parent=1 // pred_check
      _
    $region31: #{tpu_custom_call.1} parent=1 // pred_check_branch
      %60 = sbr.rel (0) target = $region33
    $region32: #{tpu_custom_call.1} parent=1 // pred_region
      %61 = dma.done [#allocation3], 4096
    $region33: #{tpu_custom_call.1} parent=1 // pred_fallthru
      _
    // Predicated region
    $region34: #{tpu_custom_call.1} parent=1 // pred_check
      _
    $region35: #{tpu_custom_call.1} parent=1 // pred_check_branch
      %63 = sbr.rel (0) target = $region37
    $region36: #{tpu_custom_call.1} parent=1 // pred_region
      %64 = dma.done [#allocation6], 2048
    $region37: #{tpu_custom_call.1} parent=1 // pred_fallthru
      _
    // Predicated region
    $region38: #{tpu_custom_call.1} parent=1 // pred_check
      _
    $region39: #{tpu_custom_call.1} parent=1 // pred_check_branch
      %66 = sbr.rel (0) target = $region41
    $region40: #{tpu_custom_call.1} parent=1 // pred_region
      %67 = dma.done [#allocation6], 2048
    $region41: #{tpu_custom_call.1} parent=1 // pred_fallthru
      _
    %v69 = vld [vmem:[#allocation2] sm:$0xff]
    %v70 = vld [vmem:[#allocation2 + $0x8] sm:$0xff]
    %v71 = vld [vmem:[#allocation2 + $0x10] sm:$0xff]
    %v72 = vld [vmem:[#allocation2 + $0x18] sm:$0xff]
    %v73 = vld [vmem:[#allocation2 + $0x20] sm:$0xff]
    %v74 = vld [vmem:[#allocation2 + $0x28] sm:$0xff]
    %v75 = vld [vmem:[#allocation2 + $0x30] sm:$0xff]
    %v76 = vld [vmem:[#allocation2 + $0x38] sm:$0xff]
    %v77 = vld [vmem:[#allocation2 + $0x40] sm:$0xff]
    %v78 = vld [vmem:[#allocation2 + $0x48] sm:$0xff]
    %v79 = vld [vmem:[#allocation2 + $0x50] sm:$0xff]
    %v80 = vld [vmem:[#allocation2 + $0x58] sm:$0xff]
    %v81 = vld [vmem:[#allocation2 + $0x60] sm:$0xff]
    %v82 = vld [vmem:[#allocation2 + $0x68] sm:$0xff]
    %v83 = vld [vmem:[#allocation2 + $0x70] sm:$0xff]
    %v84 = vld [vmem:[#allocation2 + $0x78] sm:$0xff]
    %v85 = vld [vmem:[#allocation2 + $0x80] sm:$0xff]
    %v86 = vld [vmem:[#allocation2 + $0x88] sm:$0xff]
    %v87 = vld [vmem:[#allocation2 + $0x90] sm:$0xff]
    %v88 = vld [vmem:[#allocation2 + $0x98] sm:$0xff]
    %v89 = vld [vmem:[#allocation2 + $0xa0] sm:$0xff]
    %v90 = vld [vmem:[#allocation2 + $0xa8] sm:$0xff]
    %v91 = vld [vmem:[#allocation2 + $0xb0] sm:$0xff]
    %v92 = vld [vmem:[#allocation2 + $0xb8] sm:$0xff]
    %v93 = vld [vmem:[#allocation2 + $0xc0] sm:$0xff]
    %v94 = vld [vmem:[#allocation2 + $0xc8] sm:$0xff]
    %v95 = vld [vmem:[#allocation2 + $0xd0] sm:$0xff]
    %v96 = vld [vmem:[#allocation2 + $0xd8] sm:$0xff]
    %v97 = vld [vmem:[#allocation2 + $0xe0] sm:$0xff]
    %v98 = vld [vmem:[#allocation2 + $0xe8] sm:$0xff]
    %v99 = vld [vmem:[#allocation2 + $0xf0] sm:$0xff]
    %v100 = vld [vmem:[#allocation2 + $0xf8] sm:$0xff]
    %v101 = vld [vmem:[%s1] sm:$0x1]
    %v102 = vld [vmem:[%s2] sm:$0x1]
    %103 = vadd.xlane.f32.xlu0 %v69
    %v104 = vpop.xlane.xlu0 %103
    %105 = vadd.xlane.f32.xlu0 %v70
    %v106 = vpop.xlane.xlu0 %105
    %107 = vadd.xlane.f32.xlu0 %v71
    %v108 = vpop.xlane.xlu0 %107
    %109 = vadd.xlane.f32.xlu0 %v72
    %v110 = vpop.xlane.xlu0 %109
    %111 = vadd.xlane.f32.xlu0 %v73
    %v112 = vpop.xlane.xlu0 %111
    %113 = vadd.xlane.f32.xlu0 %v74
    %v114 = vpop.xlane.xlu0 %113
    %115 = vadd.xlane.f32.xlu0 %v75
    %v116 = vpop.xlane.xlu0 %115
    %117 = vadd.xlane.f32.xlu0 %v76
    %v118 = vpop.xlane.xlu0 %117
    %119 = vadd.xlane.f32.xlu0 %v77
    %v120 = vpop.xlane.xlu0 %119
    %121 = vadd.xlane.f32.xlu0 %v78
    %v122 = vpop.xlane.xlu0 %121
    %123 = vadd.xlane.f32.xlu0 %v79
    %v124 = vpop.xlane.xlu0 %123
    %125 = vadd.xlane.f32.xlu0 %v80
    %v126 = vpop.xlane.xlu0 %125
    %127 = vadd.xlane.f32.xlu0 %v81
    %v128 = vpop.xlane.xlu0 %127
    %129 = vadd.xlane.f32.xlu0 %v82
    %v130 = vpop.xlane.xlu0 %129
    %131 = vadd.xlane.f32.xlu0 %v83
    %v132 = vpop.xlane.xlu0 %131
    %133 = vadd.xlane.f32.xlu0 %v84
    %v134 = vpop.xlane.xlu0 %133
    %135 = vadd.xlane.f32.xlu0 %v85
    %v136 = vpop.xlane.xlu0 %135
    %137 = vadd.xlane.f32.xlu0 %v86
    %v138 = vpop.xlane.xlu0 %137
    %139 = vadd.xlane.f32.xlu0 %v87
    %v140 = vpop.xlane.xlu0 %139
    %141 = vadd.xlane.f32.xlu0 %v88
    %v142 = vpop.xlane.xlu0 %141
    %143 = vadd.xlane.f32.xlu0 %v89
    %v144 = vpop.xlane.xlu0 %143
    %145 = vadd.xlane.f32.xlu0 %v90
    %v146 = vpop.xlane.xlu0 %145
    %147 = vadd.xlane.f32.xlu0 %v91
    %v148 = vpop.xlane.xlu0 %147
    %149 = vadd.xlane.f32.xlu0 %v92
    %v150 = vpop.xlane.xlu0 %149
    %151 = vadd.xlane.f32.xlu0 %v93
    %v152 = vpop.xlane.xlu0 %151
    %153 = vadd.xlane.f32.xlu0 %v94
    %v154 = vpop.xlane.xlu0 %153
    %155 = vadd.xlane.f32.xlu0 %v95
    %v156 = vpop.xlane.xlu0 %155
    %157 = vadd.xlane.f32.xlu0 %v96
    %v158 = vpop.xlane.xlu0 %157
    %159 = vadd.xlane.f32.xlu0 %v97
    %v160 = vpop.xlane.xlu0 %159
    %161 = vadd.xlane.f32.xlu0 %v98
    %v162 = vpop.xlane.xlu0 %161
    %163 = vadd.xlane.f32.xlu0 %v99
    %v164 = vpop.xlane.xlu0 %163
    %165 = vadd.xlane.f32.xlu0 %v100
    %v166 = vpop.xlane.xlu0 %165
    %v167 = vrcp.pop 128.0
    %v168 = vmul.f32 %v104, %v167
    %v169 = vmul.f32 %v106, %v167
    %v170 = vmul.f32 %v108, %v167
    %v171 = vmul.f32 %v110, %v167
    %v172 = vmul.f32 %v112, %v167
    %v173 = vmul.f32 %v114, %v167
    %v174 = vmul.f32 %v116, %v167
    %v175 = vmul.f32 %v118, %v167
    %v176 = vmul.f32 %v120, %v167
    %v177 = vmul.f32 %v122, %v167
    %v178 = vmul.f32 %v124, %v167
    %v179 = vmul.f32 %v126, %v167
    %v180 = vmul.f32 %v128, %v167
    %v181 = vmul.f32 %v130, %v167
    %v182 = vmul.f32 %v132, %v167
    %v183 = vmul.f32 %v134, %v167
    %v184 = vmul.f32 %v136, %v167
    %v185 = vmul.f32 %v138, %v167
    %v186 = vmul.f32 %v140, %v167
    %v187 = vmul.f32 %v142, %v167
    %v188 = vmul.f32 %v144, %v167
    %v189 = vmul.f32 %v146, %v167
    %v190 = vmul.f32 %v148, %v167
    %v191 = vmul.f32 %v150, %v167
    %v192 = vmul.f32 %v152, %v167
    %v193 = vmul.f32 %v154, %v167
    %v194 = vmul.f32 %v156, %v167
    %v195 = vmul.f32 %v158, %v167
    %v196 = vmul.f32 %v160, %v167
    %v197 = vmul.f32 %v162, %v167
    %v198 = vmul.f32 %v164, %v167
    %v199 = vmul.f32 %v166, %v167
    %v200 = vsub.f32 %v69, %v168
    %v201 = vsub.f32 %v70, %v169
    %v202 = vsub.f32 %v71, %v170
    %v203 = vsub.f32 %v72, %v171
    %v204 = vsub.f32 %v73, %v172
    %v205 = vsub.f32 %v74, %v173
    %v206 = vsub.f32 %v75, %v174
    %v207 = vsub.f32 %v76, %v175
    %v208 = vsub.f32 %v77, %v176
    %v209 = vsub.f32 %v78, %v177
    %v210 = vsub.f32 %v79, %v178
    %v211 = vsub.f32 %v80, %v179
    %v212 = vsub.f32 %v81, %v180
    %v213 = vsub.f32 %v82, %v181
    %v214 = vsub.f32 %v83, %v182
    %v215 = vsub.f32 %v84, %v183
    %v216 = vsub.f32 %v85, %v184
    %v217 = vsub.f32 %v86, %v185
    %v218 = vsub.f32 %v87, %v186
    %v219 = vsub.f32 %v88, %v187
    %v220 = vsub.f32 %v89, %v188
    %v221 = vsub.f32 %v90, %v189
    %v222 = vsub.f32 %v91, %v190
    %v223 = vsub.f32 %v92, %v191
    %v224 = vsub.f32 %v93, %v192
    %v225 = vsub.f32 %v94, %v193
    %v226 = vsub.f32 %v95, %v194
    %v227 = vsub.f32 %v96, %v195
    %v228 = vsub.f32 %v97, %v196
    %v229 = vsub.f32 %v98, %v197
    %v230 = vsub.f32 %v99, %v198
    %v231 = vsub.f32 %v100, %v199
    %v232 = vmul.f32 %v200, %v200
    %v233 = vmul.f32 %v201, %v201
    %v234 = vmul.f32 %v202, %v202
    %v235 = vmul.f32 %v203, %v203
    %v236 = vmul.f32 %v204, %v204
    %v237 = vmul.f32 %v205, %v205
    %v238 = vmul.f32 %v206, %v206
    %v239 = vmul.f32 %v207, %v207
    %v240 = vmul.f32 %v208, %v208
    %v241 = vmul.f32 %v209, %v209
    %v242 = vmul.f32 %v210, %v210
    %v243 = vmul.f32 %v211, %v211
    %v244 = vmul.f32 %v212, %v212
    %v245 = vmul.f32 %v213, %v213
    %v246 = vmul.f32 %v214, %v214
    %v247 = vmul.f32 %v215, %v215
    %v248 = vmul.f32 %v216, %v216
    %v249 = vmul.f32 %v217, %v217
    %v250 = vmul.f32 %v218, %v218
    %v251 = vmul.f32 %v219, %v219
    %v252 = vmul.f32 %v220, %v220
    %v253 = vmul.f32 %v221, %v221
    %v254 = vmul.f32 %v222, %v222
    %v255 = vmul.f32 %v223, %v223
    %v256 = vmul.f32 %v224, %v224
    %v257 = vmul.f32 %v225, %v225
    %v258 = vmul.f32 %v226, %v226
    %v259 = vmul.f32 %v227, %v227
    %v260 = vmul.f32 %v228, %v228
    %v261 = vmul.f32 %v229, %v229
    %v262 = vmul.f32 %v230, %v230
    %v263 = vmul.f32 %v231, %v231
    %264 = vadd.xlane.f32.xlu0 %v232
    %v265 = vpop.xlane.xlu0 %264
    %266 = vadd.xlane.f32.xlu0 %v233
    %v267 = vpop.xlane.xlu0 %266
    %268 = vadd.xlane.f32.xlu0 %v234
    %v269 = vpop.xlane.xlu0 %268
    %270 = vadd.xlane.f32.xlu0 %v235
    %v271 = vpop.xlane.xlu0 %270
    %272 = vadd.xlane.f32.xlu0 %v236
    %v273 = vpop.xlane.xlu0 %272
    %274 = vadd.xlane.f32.xlu0 %v237
    %v275 = vpop.xlane.xlu0 %274
    %276 = vadd.xlane.f32.xlu0 %v238
    %v277 = vpop.xlane.xlu0 %276
    %278 = vadd.xlane.f32.xlu0 %v239
    %v279 = vpop.xlane.xlu0 %278
    %280 = vadd.xlane.f32.xlu0 %v240
    %v281 = vpop.xlane.xlu0 %280
    %282 = vadd.xlane.f32.xlu0 %v241
    %v283 = vpop.xlane.xlu0 %282
    %284 = vadd.xlane.f32.xlu0 %v242
    %v285 = vpop.xlane.xlu0 %284
    %286 = vadd.xlane.f32.xlu0 %v243
    %v287 = vpop.xlane.xlu0 %286
    %288 = vadd.xlane.f32.xlu0 %v244
    %v289 = vpop.xlane.xlu0 %288
    %290 = vadd.xlane.f32.xlu0 %v245
    %v291 = vpop.xlane.xlu0 %290
    %292 = vadd.xlane.f32.xlu0 %v246
    %v293 = vpop.xlane.xlu0 %292
    %294 = vadd.xlane.f32.xlu0 %v247
    %v295 = vpop.xlane.xlu0 %294
    %296 = vadd.xlane.f32.xlu0 %v248
    %v297 = vpop.xlane.xlu0 %296
    %298 = vadd.xlane.f32.xlu0 %v249
    %v299 = vpop.xlane.xlu0 %298
    %300 = vadd.xlane.f32.xlu0 %v250
    %v301 = vpop.xlane.xlu0 %300
    %302 = vadd.xlane.f32.xlu0 %v251
    %v303 = vpop.xlane.xlu0 %302
    %304 = vadd.xlane.f32.xlu0 %v252
    %v305 = vpop.xlane.xlu0 %304
    %306 = vadd.xlane.f32.xlu0 %v253
    %v307 = vpop.xlane.xlu0 %306
    %308 = vadd.xlane.f32.xlu0 %v254
    %v309 = vpop.xlane.xlu0 %308
    %310 = vadd.xlane.f32.xlu0 %v255
    %v311 = vpop.xlane.xlu0 %310
    %312 = vadd.xlane.f32.xlu0 %v256
    %v313 = vpop.xlane.xlu0 %312
    %314 = vadd.xlane.f32.xlu0 %v257
    %v315 = vpop.xlane.xlu0 %314
    %316 = vadd.xlane.f32.xlu0 %v258
    %v317 = vpop.xlane.xlu0 %316
    %318 = vadd.xlane.f32.xlu0 %v259
    %v319 = vpop.xlane.xlu0 %318
    %320 = vadd.xlane.f32.xlu0 %v260
    %v321 = vpop.xlane.xlu0 %320
    %322 = vadd.xlane.f32.xlu0 %v261
    %v323 = vpop.xlane.xlu0 %322
    %324 = vadd.xlane.f32.xlu0 %v262
    %v325 = vpop.xlane.xlu0 %324
    %326 = vadd.xlane.f32.xlu0 %v263
    %v327 = vpop.xlane.xlu0 %326
    %v328 = vmul.f32 %v265, %v167
    %v329 = vmul.f32 %v267, %v167
    %v330 = vmul.f32 %v269, %v167
    %v331 = vmul.f32 %v271, %v167
    %v332 = vmul.f32 %v273, %v167
    %v333 = vmul.f32 %v275, %v167
    %v334 = vmul.f32 %v277, %v167
    %v335 = vmul.f32 %v279, %v167
    %v336 = vmul.f32 %v281, %v167
    %v337 = vmul.f32 %v283, %v167
    %v338 = vmul.f32 %v285, %v167
    %v339 = vmul.f32 %v287, %v167
    %v340 = vmul.f32 %v289, %v167
    %v341 = vmul.f32 %v291, %v167
    %v342 = vmul.f32 %v293, %v167
    %v343 = vmul.f32 %v295, %v167
    %v344 = vmul.f32 %v297, %v167
    %v345 = vmul.f32 %v299, %v167
    %v346 = vmul.f32 %v301, %v167
    %v347 = vmul.f32 %v303, %v167
    %v348 = vmul.f32 %v305, %v167
    %v349 = vmul.f32 %v307, %v167
    %v350 = vmul.f32 %v309, %v167
    %v351 = vmul.f32 %v311, %v167
    %v352 = vmul.f32 %v313, %v167
    %v353 = vmul.f32 %v315, %v167
    %v354 = vmul.f32 %v317, %v167
    %v355 = vmul.f32 %v319, %v167
    %v356 = vmul.f32 %v321, %v167
    %v357 = vmul.f32 %v323, %v167
    %v358 = vmul.f32 %v325, %v167
    %v359 = vmul.f32 %v327, %v167
    %v360 = vadd.f32 %v328, 1e-05
    %v361 = vadd.f32 %v329, 1e-05
    %v362 = vadd.f32 %v330, 1e-05
    %v363 = vadd.f32 %v331, 1e-05
    %v364 = vadd.f32 %v332, 1e-05
    %v365 = vadd.f32 %v333, 1e-05
    %v366 = vadd.f32 %v334, 1e-05
    %v367 = vadd.f32 %v335, 1e-05
    %v368 = vadd.f32 %v336, 1e-05
    %v369 = vadd.f32 %v337, 1e-05
    %v370 = vadd.f32 %v338, 1e-05
    %v371 = vadd.f32 %v339, 1e-05
    %v372 = vadd.f32 %v340, 1e-05
    %v373 = vadd.f32 %v341, 1e-05
    %v374 = vadd.f32 %v342, 1e-05
    %v375 = vadd.f32 %v343, 1e-05
    %v376 = vadd.f32 %v344, 1e-05
    %v377 = vadd.f32 %v345, 1e-05
    %v378 = vadd.f32 %v346, 1e-05
    %v379 = vadd.f32 %v347, 1e-05
    %v380 = vadd.f32 %v348, 1e-05
    %v381 = vadd.f32 %v349, 1e-05
    %v382 = vadd.f32 %v350, 1e-05
    %v383 = vadd.f32 %v351, 1e-05
    %v384 = vadd.f32 %v352, 1e-05
    %v385 = vadd.f32 %v353, 1e-05
    %v386 = vadd.f32 %v354, 1e-05
    %v387 = vadd.f32 %v355, 1e-05
    %v388 = vadd.f32 %v356, 1e-05
    %v389 = vadd.f32 %v357, 1e-05
    %v390 = vadd.f32 %v358, 1e-05
    %v391 = vadd.f32 %v359, 1e-05
    %v392 = vrsqrt.pop %v360
    %v393 = vrsqrt.pop %v361
    %v394 = vrsqrt.pop %v362
    %v395 = vrsqrt.pop %v363
    %v396 = vrsqrt.pop %v364
    %v397 = vrsqrt.pop %v365
    %v398 = vrsqrt.pop %v366
    %v399 = vrsqrt.pop %v367
    %v400 = vrsqrt.pop %v368
    %v401 = vrsqrt.pop %v369
    %v402 = vrsqrt.pop %v370
    %v403 = vrsqrt.pop %v371
    %v404 = vrsqrt.pop %v372
    %v405 = vrsqrt.pop %v373
    %v406 = vrsqrt.pop %v374
    %v407 = vrsqrt.pop %v375
    %v408 = vrsqrt.pop %v376
    %v409 = vrsqrt.pop %v377
    %v410 = vrsqrt.pop %v378
    %v411 = vrsqrt.pop %v379
    %v412 = vrsqrt.pop %v380
    %v413 = vrsqrt.pop %v381
    %v414 = vrsqrt.pop %v382
    %v415 = vrsqrt.pop %v383
    %v416 = vrsqrt.pop %v384
    %v417 = vrsqrt.pop %v385
    %v418 = vrsqrt.pop %v386
    %v419 = vrsqrt.pop %v387
    %v420 = vrsqrt.pop %v388
    %v421 = vrsqrt.pop %v389
    %v422 = vrsqrt.pop %v390
    %v423 = vrsqrt.pop %v391
    %v424 = vmul.f32 %v200, %v392
    %v425 = vmul.f32 %v201, %v393
    %v426 = vmul.f32 %v202, %v394
    %v427 = vmul.f32 %v203, %v395
    %v428 = vmul.f32 %v204, %v396
    %v429 = vmul.f32 %v205, %v397
    %v430 = vmul.f32 %v206, %v398
    %v431 = vmul.f32 %v207, %v399
    %v432 = vmul.f32 %v208, %v400
    %v433 = vmul.f32 %v209, %v401
    %v434 = vmul.f32 %v210, %v402
    %v435 = vmul.f32 %v211, %v403
    %v436 = vmul.f32 %v212, %v404
    %v437 = vmul.f32 %v213, %v405
    %v438 = vmul.f32 %v214, %v406
    %v439 = vmul.f32 %v215, %v407
    %v440 = vmul.f32 %v216, %v408
    %v441 = vmul.f32 %v217, %v409
    %v442 = vmul.f32 %v218, %v410
    %v443 = vmul.f32 %v219, %v411
    %v444 = vmul.f32 %v220, %v412
    %v445 = vmul.f32 %v221, %v413
    %v446 = vmul.f32 %v222, %v414
    %v447 = vmul.f32 %v223, %v415
    %v448 = vmul.f32 %v224, %v416
    %v449 = vmul.f32 %v225, %v417
    %v450 = vmul.f32 %v226, %v418
    %v451 = vmul.f32 %v227, %v419
    %v452 = vmul.f32 %v228, %v420
    %v453 = vmul.f32 %v229, %v421
    %v454 = vmul.f32 %v230, %v422
    %v455 = vmul.f32 %v231, %v423
    %v457 = vlaneseq
    %v458 = vshrl.u32 %v457, 7
    %v459 = vsub.s32 0, %v458
    %v460 = vrot.slane %v101, %v459
    %v462 = vmul.f32 %v424, %v460
    %v463 = vmul.f32 %v425, %v460
    %v464 = vmul.f32 %v426, %v460
    %v465 = vmul.f32 %v427, %v460
    %v466 = vmul.f32 %v428, %v460
    %v467 = vmul.f32 %v429, %v460
    %v468 = vmul.f32 %v430, %v460
    %v469 = vmul.f32 %v431, %v460
    %v470 = vmul.f32 %v432, %v460
    %v471 = vmul.f32 %v433, %v460
    %v472 = vmul.f32 %v434, %v460
    %v473 = vmul.f32 %v435, %v460
    %v474 = vmul.f32 %v436, %v460
    %v475 = vmul.f32 %v437, %v460
    %v476 = vmul.f32 %v438, %v460
    %v477 = vmul.f32 %v439, %v460
    %v478 = vmul.f32 %v440, %v460
    %v479 = vmul.f32 %v441, %v460
    %v480 = vmul.f32 %v442, %v460
    %v481 = vmul.f32 %v443, %v460
    %v482 = vmul.f32 %v444, %v460
    %v483 = vmul.f32 %v445, %v460
    %v484 = vmul.f32 %v446, %v460
    %v485 = vmul.f32 %v447, %v460
    %v486 = vmul.f32 %v448, %v460
    %v487 = vmul.f32 %v449, %v460
    %v488 = vmul.f32 %v450, %v460
    %v489 = vmul.f32 %v451, %v460
    %v490 = vmul.f32 %v452, %v460
    %v491 = vmul.f32 %v453, %v460
    %v492 = vmul.f32 %v454, %v460
    %v493 = vmul.f32 %v455, %v460
    %v495 = vlaneseq
    %v496 = vshrl.u32 %v495, 7
    %v497 = vsub.s32 0, %v496
    %v498 = vrot.slane %v102, %v497
    %v500 = vadd.f32 %v462, %v498
    %v501 = vadd.f32 %v463, %v498
    %v502 = vadd.f32 %v464, %v498
    %v503 = vadd.f32 %v465, %v498
    %v504 = vadd.f32 %v466, %v498
    %v505 = vadd.f32 %v467, %v498
    %v506 = vadd.f32 %v468, %v498
    %v507 = vadd.f32 %v469, %v498
    %v508 = vadd.f32 %v470, %v498
    %v509 = vadd.f32 %v471, %v498
    %v510 = vadd.f32 %v472, %v498
    %v511 = vadd.f32 %v473, %v498
    %v512 = vadd.f32 %v474, %v498
    %v513 = vadd.f32 %v475, %v498
    %v514 = vadd.f32 %v476, %v498
    %v515 = vadd.f32 %v477, %v498
    %v516 = vadd.f32 %v478, %v498
    %v517 = vadd.f32 %v479, %v498
    %v518 = vadd.f32 %v480, %v498
    %v519 = vadd.f32 %v481, %v498
    %v520 = vadd.f32 %v482, %v498
    %v521 = vadd.f32 %v483, %v498
    %v522 = vadd.f32 %v484, %v498
    %v523 = vadd.f32 %v485, %v498
    %v524 = vadd.f32 %v486, %v498
    %v525 = vadd.f32 %v487, %v498
    %v526 = vadd.f32 %v488, %v498
    %v527 = vadd.f32 %v489, %v498
    %v528 = vadd.f32 %v490, %v498
    %v529 = vadd.f32 %v491, %v498
    %v530 = vadd.f32 %v492, %v498
    %v531 = vadd.f32 %v493, %v498
    %v532 = vpack.c.bf16 %v501, %v500
    %v533 = vpack.c.bf16 %v503, %v502
    %v534 = vpack.c.bf16 %v505, %v504
    %v535 = vpack.c.bf16 %v507, %v506
    %v536 = vpack.c.bf16 %v509, %v508
    %v537 = vpack.c.bf16 %v511, %v510
    %v538 = vpack.c.bf16 %v513, %v512
    %v539 = vpack.c.bf16 %v515, %v514
    %v540 = vpack.c.bf16 %v517, %v516
    %v541 = vpack.c.bf16 %v519, %v518
    %v542 = vpack.c.bf16 %v521, %v520
    %v543 = vpack.c.bf16 %v523, %v522
    %v544 = vpack.c.bf16 %v525, %v524
    %v545 = vpack.c.bf16 %v527, %v526
    %v546 = vpack.c.bf16 %v529, %v528
    %v547 = vpack.c.bf16 %v531, %v530
    %v548 = vld [vmem:[#allocation5] sm:$0xff]
    %v549 = vld [vmem:[#allocation5 + $0x8] sm:$0xff]
    %v550 = vld [vmem:[#allocation5 + $0x10] sm:$0xff]
    %v551 = vld [vmem:[#allocation5 + $0x18] sm:$0xff]
    %v552 = vld [vmem:[#allocation5 + $0x20] sm:$0xff]
    %v553 = vld [vmem:[#allocation5 + $0x28] sm:$0xff]
    %v554 = vld [vmem:[#allocation5 + $0x30] sm:$0xff]
    %v555 = vld [vmem:[#allocation5 + $0x38] sm:$0xff]
    %v556 = vld [vmem:[#allocation5 + $0x40] sm:$0xff]
    %v557 = vld [vmem:[#allocation5 + $0x48] sm:$0xff]
    %v558 = vld [vmem:[#allocation5 + $0x50] sm:$0xff]
    %v559 = vld [vmem:[#allocation5 + $0x58] sm:$0xff]
    %v560 = vld [vmem:[#allocation5 + $0x60] sm:$0xff]
    %v561 = vld [vmem:[#allocation5 + $0x68] sm:$0xff]
    %v562 = vld [vmem:[#allocation5 + $0x70] sm:$0xff]
    %v563 = vld [vmem:[#allocation5 + $0x78] sm:$0xff]
    %v564 = vld [vmem:[%s4] sm:$0x3]
    %v566 = vlaneseq
    %v567 = vshrl.u32 %v566, 7
    %v568 = vsub.s32 0, %v567
    %v569 = vrot.slane %v564, %v568
    %v570 = vlaneseq
    %v571 = vshrl.u32 %v570, 7
    %v572 = vsub.s32 1, %v571
    %v573 = vrot.slane %v564, %v572
    %v592 = vunpack.c.l.b16 %v548
    %v593 = vunpack.c.h.b16 %v548
    %v594 = vunpack.c.l.b16 %v549
    %v595 = vunpack.c.h.b16 %v549
    %v596 = vunpack.c.l.b16 %v550
    %v597 = vunpack.c.h.b16 %v550
    %v598 = vunpack.c.l.b16 %v551
    %v599 = vunpack.c.h.b16 %v551
    %v600 = vunpack.c.l.b16 %v552
    %v601 = vunpack.c.h.b16 %v552
    %v602 = vunpack.c.l.b16 %v553
    %v603 = vunpack.c.h.b16 %v553
    %v604 = vunpack.c.l.b16 %v554
    %v605 = vunpack.c.h.b16 %v554
    %v606 = vunpack.c.l.b16 %v555
    %v607 = vunpack.c.h.b16 %v555
    %v608 = vunpack.c.l.b16 %v556
    %v609 = vunpack.c.h.b16 %v556
    %v610 = vunpack.c.l.b16 %v557
    %v611 = vunpack.c.h.b16 %v557
    %v612 = vunpack.c.l.b16 %v558
    %v613 = vunpack.c.h.b16 %v558
    %v614 = vunpack.c.l.b16 %v559
    %v615 = vunpack.c.h.b16 %v559
    %v616 = vunpack.c.l.b16 %v560
    %v617 = vunpack.c.h.b16 %v560
    %v618 = vunpack.c.l.b16 %v561
    %v619 = vunpack.c.h.b16 %v561
    %v620 = vunpack.c.l.b16 %v562
    %v621 = vunpack.c.h.b16 %v562
    %v622 = vunpack.c.l.b16 %v563
    %v623 = vunpack.c.h.b16 %v563
    %v624 = vpack.c.b16 %v594, %v592
    %v625 = vpack.c.b16 %v595, %v593
    %v626 = vpack.c.b16 %v598, %v596
    %v627 = vpack.c.b16 %v599, %v597
    %v628 = vpack.c.b16 %v602, %v600
    %v629 = vpack.c.b16 %v603, %v601
    %v630 = vpack.c.b16 %v606, %v604
    %v631 = vpack.c.b16 %v607, %v605
    %v632 = vpack.c.b16 %v610, %v608
    %v633 = vpack.c.b16 %v611, %v609
    %v634 = vpack.c.b16 %v614, %v612
    %v635 = vpack.c.b16 %v615, %v613
    %v636 = vpack.c.b16 %v618, %v616
    %v637 = vpack.c.b16 %v619, %v617
    %v638 = vpack.c.b16 %v622, %v620
    %v639 = vpack.c.b16 %v623, %v621
    %656 = vmatprep.subr.bf16.mxu0 %v625
    %657 = vmatpush1.bf16.msra.mxu0 %v624
    %658 = vmatprep.subr.bf16.mxu0 %v627
    %659 = vmatpush1.bf16.msra.mxu0 %v626
    %660 = vmatprep.subr.bf16.mxu0 %v629
    %661 = vmatpush1.bf16.msra.mxu0 %v628
    %662 = vmatprep.subr.bf16.mxu0 %v631
    %663 = vmatpush1.bf16.msra.mxu0 %v630
    %664 = vmatprep.subr.bf16.mxu0 %v633
    %665 = vmatpush1.bf16.msra.mxu0 %v632
    %666 = vmatprep.subr.bf16.mxu0 %v635
    %667 = vmatpush1.bf16.msra.mxu0 %v634
    %668 = vmatprep.subr.bf16.mxu0 %v637
    %669 = vmatpush1.bf16.msra.mxu0 %v636
    %670 = vmatprep.subr.bf16.mxu0 %v639
    %671 = vmatpush1.bf16.msra.mxu0 %v638
    %672 = vmatprep.subr.bf16.mxu0 0
    %673 = vmatpush1.bf16.msra.mxu0 0
    %674 = vmatprep.subr.bf16.mxu0 0
    %675 = vmatpush1.bf16.msra.mxu0 0
    %676 = vmatprep.subr.bf16.mxu0 0
    %677 = vmatpush1.bf16.msra.mxu0 0
    %678 = vmatprep.subr.bf16.mxu0 0
    %679 = vmatpush1.bf16.msra.mxu0 0
    %680 = vmatprep.subr.bf16.mxu0 0
    %681 = vmatpush1.bf16.msra.mxu0 0
    %682 = vmatprep.subr.bf16.mxu0 0
    %683 = vmatpush1.bf16.msra.mxu0 0
    %684 = vmatprep.subr.bf16.mxu0 0
    %685 = vmatpush1.bf16.msra.mxu0 0
    %686 = vmatprep.subr.bf16.mxu0 0
    %687 = vmatpush1.bf16.msra.mxu0 0
    %688 = vmatprep.mubr.bf16.mxu0 0
    %689 = vmatmul.mubr.bf16.gmra.mrb[0].mxu0 %v532
    %v690 = vpop.f32.mrb[0].mxu0
    %v691 = vadd.f32 %v569, %v690
    %v692 = vpop.f32.mrb[0].mxu0
    %v693 = vadd.f32 %v573, %v692
    %v694 = vpop.f32.mrb[0].mxu0
    %v695 = vadd.f32 %v569, %v694
    %v696 = vpop.f32.mrb[0].mxu0
    %v697 = vadd.f32 %v573, %v696
    %698 = vmatprep.mubr.bf16.mxu0 0
    %699 = vmatmul.mubr.bf16.gmra.mrb[0].mxu0 %v533
    %v700 = vpop.f32.mrb[0].mxu0
    %v701 = vadd.f32 %v569, %v700
    %v702 = vpop.f32.mrb[0].mxu0
    %v703 = vadd.f32 %v573, %v702
    %v704 = vpop.f32.mrb[0].mxu0
    %v705 = vadd.f32 %v569, %v704
    %v706 = vpop.f32.mrb[0].mxu0
    %v707 = vadd.f32 %v573, %v706
    %708 = vmatprep.mubr.bf16.mxu0 0
    %709 = vmatmul.mubr.bf16.gmra.mrb[0].mxu0 %v534
    %v710 = vpop.f32.mrb[0].mxu0
    %v711 = vadd.f32 %v569, %v710
    %v712 = vpop.f32.mrb[0].mxu0
    %v713 = vadd.f32 %v573, %v712
    %v714 = vpop.f32.mrb[0].mxu0
    %v715 = vadd.f32 %v569, %v714
    %v716 = vpop.f32.mrb[0].mxu0
    %v717 = vadd.f32 %v573, %v716
    %718 = vmatprep.mubr.bf16.mxu0 0
    %719 = vmatmul.mubr.bf16.gmra.mrb[0].mxu0 %v535
    %v720 = vpop.f32.mrb[0].mxu0
    %v721 = vadd.f32 %v569, %v720
    %v722 = vpop.f32.mrb[0].mxu0
    %v723 = vadd.f32 %v573, %v722
    %v724 = vpop.f32.mrb[0].mxu0
    %v725 = vadd.f32 %v569, %v724
    %v726 = vpop.f32.mrb[0].mxu0
    %v727 = vadd.f32 %v573, %v726
    %728 = vmatprep.mubr.bf16.mxu0 0
    %729 = vmatmul.mubr.bf16.gmra.mrb[0].mxu0 %v536
    %v730 = vpop.f32.mrb[0].mxu0
    %v731 = vadd.f32 %v569, %v730
    %v732 = vpop.f32.mrb[0].mxu0
    %v733 = vadd.f32 %v573, %v732
    %v734 = vpop.f32.mrb[0].mxu0
    %v735 = vadd.f32 %v569, %v734
    %v736 = vpop.f32.mrb[0].mxu0
    %v737 = vadd.f32 %v573, %v736
    %738 = vmatprep.mubr.bf16.mxu0 0
    %739 = vmatmul.mubr.bf16.gmra.mrb[0].mxu0 %v537
    %v740 = vpop.f32.mrb[0].mxu0
    %v741 = vadd.f32 %v569, %v740
    %v742 = vpop.f32.mrb[0].mxu0
    %v743 = vadd.f32 %v573, %v742
    %v744 = vpop.f32.mrb[0].mxu0
    %v745 = vadd.f32 %v569, %v744
    %v746 = vpop.f32.mrb[0].mxu0
    %v747 = vadd.f32 %v573, %v746
    %748 = vmatprep.mubr.bf16.mxu0 0
    %749 = vmatmul.mubr.bf16.gmra.mrb[0].mxu0 %v538
    %v750 = vpop.f32.mrb[0].mxu0
    %v751 = vadd.f32 %v569, %v750
    %v752 = vpop.f32.mrb[0].mxu0
    %v753 = vadd.f32 %v573, %v752
    %v754 = vpop.f32.mrb[0].mxu0
    %v755 = vadd.f32 %v569, %v754
    %v756 = vpop.f32.mrb[0].mxu0
    %v757 = vadd.f32 %v573, %v756
    %758 = vmatprep.mubr.bf16.mxu0 0
    %759 = vmatmul.mubr.bf16.gmra.mrb[0].mxu0 %v539
    %v760 = vpop.f32.mrb[0].mxu0
    %v761 = vadd.f32 %v569, %v760
    %v762 = vpop.f32.mrb[0].mxu0
    %v763 = vadd.f32 %v573, %v762
    %v764 = vpop.f32.mrb[0].mxu0
    %v765 = vadd.f32 %v569, %v764
    %v766 = vpop.f32.mrb[0].mxu0
    %v767 = vadd.f32 %v573, %v766
    %768 = vmatprep.mubr.bf16.mxu0 0
    %769 = vmatmul.mubr.bf16.gmra.mrb[0].mxu0 %v540
    %v770 = vpop.f32.mrb[0].mxu0
    %v771 = vadd.f32 %v569, %v770
    %v772 = vpop.f32.mrb[0].mxu0
    %v773 = vadd.f32 %v573, %v772
    %v774 = vpop.f32.mrb[0].mxu0
    %v775 = vadd.f32 %v569, %v774
    %v776 = vpop.f32.mrb[0].mxu0
    %v777 = vadd.f32 %v573, %v776
    %778 = vmatprep.mubr.bf16.mxu0 0
    %779 = vmatmul.mubr.bf16.gmra.mrb[0].mxu0 %v541
    %v780 = vpop.f32.mrb[0].mxu0
    %v781 = vadd.f32 %v569, %v780
    %v782 = vpop.f32.mrb[0].mxu0
    %v783 = vadd.f32 %v573, %v782
    %v784 = vpop.f32.mrb[0].mxu0
    %v785 = vadd.f32 %v569, %v784
    %v786 = vpop.f32.mrb[0].mxu0
    %v787 = vadd.f32 %v573, %v786
    %788 = vmatprep.mubr.bf16.mxu0 0
    %789 = vmatmul.mubr.bf16.gmra.mrb[0].mxu0 %v542
    %v790 = vpop.f32.mrb[0].mxu0
    %v791 = vadd.f32 %v569, %v790
    %v792 = vpop.f32.mrb[0].mxu0
    %v793 = vadd.f32 %v573, %v792
    %v794 = vpop.f32.mrb[0].mxu0
    %v795 = vadd.f32 %v569, %v794
    %v796 = vpop.f32.mrb[0].mxu0
    %v797 = vadd.f32 %v573, %v796
    %798 = vmatprep.mubr.bf16.mxu0 0
    %799 = vmatmul.mubr.bf16.gmra.mrb[0].mxu0 %v543
    %v800 = vpop.f32.mrb[0].mxu0
    %v801 = vadd.f32 %v569, %v800
    %v802 = vpop.f32.mrb[0].mxu0
    %v803 = vadd.f32 %v573, %v802
    %v804 = vpop.f32.mrb[0].mxu0
    %v805 = vadd.f32 %v569, %v804
    %v806 = vpop.f32.mrb[0].mxu0
    %v807 = vadd.f32 %v573, %v806
    %808 = vmatprep.mubr.bf16.mxu0 0
    %809 = vmatmul.mubr.bf16.gmra.mrb[0].mxu0 %v544
    %v810 = vpop.f32.mrb[0].mxu0
    %v811 = vadd.f32 %v569, %v810
    %v812 = vpop.f32.mrb[0].mxu0
    %v813 = vadd.f32 %v573, %v812
    %v814 = vpop.f32.mrb[0].mxu0
    %v815 = vadd.f32 %v569, %v814
    %v816 = vpop.f32.mrb[0].mxu0
    %v817 = vadd.f32 %v573, %v816
    %818 = vmatprep.mubr.bf16.mxu0 0
    %819 = vmatmul.mubr.bf16.gmra.mrb[0].mxu0 %v545
    %v820 = vpop.f32.mrb[0].mxu0
    %v821 = vadd.f32 %v569, %v820
    %v822 = vpop.f32.mrb[0].mxu0
    %v823 = vadd.f32 %v573, %v822
    %v824 = vpop.f32.mrb[0].mxu0
    %v825 = vadd.f32 %v569, %v824
    %v826 = vpop.f32.mrb[0].mxu0
    %v827 = vadd.f32 %v573, %v826
    %828 = vmatprep.mubr.bf16.mxu0 0
    %829 = vmatmul.mubr.bf16.gmra.mrb[0].mxu0 %v546
    %v830 = vpop.f32.mrb[0].mxu0
    %v831 = vadd.f32 %v569, %v830
    %v832 = vpop.f32.mrb[0].mxu0
    %v833 = vadd.f32 %v573, %v832
    %v834 = vpop.f32.mrb[0].mxu0
    %v835 = vadd.f32 %v569, %v834
    %v836 = vpop.f32.mrb[0].mxu0
    %v837 = vadd.f32 %v573, %v836
    %838 = vmatprep.mubr.bf16.mxu0 0
    %839 = vmatmul.mubr.bf16.gmra.mrb[0].mxu0 %v547
    %v840 = vpop.f32.mrb[0].mxu0
    %v841 = vadd.f32 %v569, %v840
    %v842 = vpop.f32.mrb[0].mxu0
    %v843 = vadd.f32 %v573, %v842
    %v844 = vpop.f32.mrb[0].mxu0
    %v845 = vadd.f32 %v569, %v844
    %v846 = vpop.f32.mrb[0].mxu0
    %v847 = vadd.f32 %v573, %v846
    %848 = vdwg.mxu0
    %v849 = vmul.f32 %v691, 0.5
    %v850 = vmul.f32 %v693, 0.5
    %v851 = vmul.f32 %v695, 0.5
    %v852 = vmul.f32 %v697, 0.5
    %v853 = vmul.f32 %v701, 0.5
    %v854 = vmul.f32 %v703, 0.5
    %v855 = vmul.f32 %v705, 0.5
    %v856 = vmul.f32 %v707, 0.5
    %v857 = vmul.f32 %v711, 0.5
    %v858 = vmul.f32 %v713, 0.5
    %v859 = vmul.f32 %v715, 0.5
    %v860 = vmul.f32 %v717, 0.5
    %v861 = vmul.f32 %v721, 0.5
    %v862 = vmul.f32 %v723, 0.5
    %v863 = vmul.f32 %v725, 0.5
    %v864 = vmul.f32 %v727, 0.5
    %v865 = vmul.f32 %v731, 0.5
    %v866 = vmul.f32 %v733, 0.5
    %v867 = vmul.f32 %v735, 0.5
    %v868 = vmul.f32 %v737, 0.5
    %v869 = vmul.f32 %v741, 0.5
    %v870 = vmul.f32 %v743, 0.5
    %v871 = vmul.f32 %v745, 0.5
    %v872 = vmul.f32 %v747, 0.5
    %v873 = vmul.f32 %v751, 0.5
    %v874 = vmul.f32 %v753, 0.5
    %v875 = vmul.f32 %v755, 0.5
    %v876 = vmul.f32 %v757, 0.5
    %v877 = vmul.f32 %v761, 0.5
    %v878 = vmul.f32 %v763, 0.5
    %v879 = vmul.f32 %v765, 0.5
    %v880 = vmul.f32 %v767, 0.5
    %v881 = vmul.f32 %v771, 0.5
    %v882 = vmul.f32 %v773, 0.5
    %v883 = vmul.f32 %v775, 0.5
    %v884 = vmul.f32 %v777, 0.5
    %v885 = vmul.f32 %v781, 0.5
    %v886 = vmul.f32 %v783, 0.5
    %v887 = vmul.f32 %v785, 0.5
    %v888 = vmul.f32 %v787, 0.5
    %v889 = vmul.f32 %v791, 0.5
    %v890 = vmul.f32 %v793, 0.5
    %v891 = vmul.f32 %v795, 0.5
    %v892 = vmul.f32 %v797, 0.5
    %v893 = vmul.f32 %v801, 0.5
    %v894 = vmul.f32 %v803, 0.5
    %v895 = vmul.f32 %v805, 0.5
    %v896 = vmul.f32 %v807, 0.5
    %v897 = vmul.f32 %v811, 0.5
    %v898 = vmul.f32 %v813, 0.5
    %v899 = vmul.f32 %v815, 0.5
    %v900 = vmul.f32 %v817, 0.5
    %v901 = vmul.f32 %v821, 0.5
    %v902 = vmul.f32 %v823, 0.5
    %v903 = vmul.f32 %v825, 0.5
    %v904 = vmul.f32 %v827, 0.5
    %v905 = vmul.f32 %v831, 0.5
    %v906 = vmul.f32 %v833, 0.5
    %v907 = vmul.f32 %v835, 0.5
    %v908 = vmul.f32 %v837, 0.5
    %v909 = vmul.f32 %v841, 0.5
    %v910 = vmul.f32 %v843, 0.5
    %v911 = vmul.f32 %v845, 0.5
    %v912 = vmul.f32 %v847, 0.5
    %v913 = vmul.f32 %v691, 0.70710677
    %v914 = vmul.f32 %v693, 0.70710677
    %v915 = vmul.f32 %v695, 0.70710677
    %v916 = vmul.f32 %v697, 0.70710677
    %v917 = vmul.f32 %v701, 0.70710677
    %v918 = vmul.f32 %v703, 0.70710677
    %v919 = vmul.f32 %v705, 0.70710677
    %v920 = vmul.f32 %v707, 0.70710677
    %v921 = vmul.f32 %v711, 0.70710677
    %v922 = vmul.f32 %v713, 0.70710677
    %v923 = vmul.f32 %v715, 0.70710677
    %v924 = vmul.f32 %v717, 0.70710677
    %v925 = vmul.f32 %v721, 0.70710677
    %v926 = vmul.f32 %v723, 0.70710677
    %v927 = vmul.f32 %v725, 0.70710677
    %v928 = vmul.f32 %v727, 0.70710677
    %v929 = vmul.f32 %v731, 0.70710677
    %v930 = vmul.f32 %v733, 0.70710677
    %v931 = vmul.f32 %v735, 0.70710677
    %v932 = vmul.f32 %v737, 0.70710677
    %v933 = vmul.f32 %v741, 0.70710677
    %v934 = vmul.f32 %v743, 0.70710677
    %v935 = vmul.f32 %v745, 0.70710677
    %v936 = vmul.f32 %v747, 0.70710677
    %v937 = vmul.f32 %v751, 0.70710677
    %v938 = vmul.f32 %v753, 0.70710677
    %v939 = vmul.f32 %v755, 0.70710677
    %v940 = vmul.f32 %v757, 0.70710677
    %v941 = vmul.f32 %v761, 0.70710677
    %v942 = vmul.f32 %v763, 0.70710677
    %v943 = vmul.f32 %v765, 0.70710677
    %v944 = vmul.f32 %v767, 0.70710677
    %v945 = vmul.f32 %v771, 0.70710677
    %v946 = vmul.f32 %v773, 0.70710677
    %v947 = vmul.f32 %v775, 0.70710677
    %v948 = vmul.f32 %v777, 0.70710677
    %v949 = vmul.f32 %v781, 0.70710677
    %v950 = vmul.f32 %v783, 0.70710677
    %v951 = vmul.f32 %v785, 0.70710677
    %v952 = vmul.f32 %v787, 0.70710677
    %v953 = vmul.f32 %v791, 0.70710677
    %v954 = vmul.f32 %v793, 0.70710677
    %v955 = vmul.f32 %v795, 0.70710677
    %v956 = vmul.f32 %v797, 0.70710677
    %v957 = vmul.f32 %v801, 0.70710677
    %v958 = vmul.f32 %v803, 0.70710677
    %v959 = vmul.f32 %v805, 0.70710677
    %v960 = vmul.f32 %v807, 0.70710677
    %v961 = vmul.f32 %v811, 0.70710677
    %v962 = vmul.f32 %v813, 0.70710677
    %v963 = vmul.f32 %v815, 0.70710677
    %v964 = vmul.f32 %v817, 0.70710677
    %v965 = vmul.f32 %v821, 0.70710677
    %v966 = vmul.f32 %v823, 0.70710677
    %v967 = vmul.f32 %v825, 0.70710677
    %v968 = vmul.f32 %v827, 0.70710677
    %v969 = vmul.f32 %v831, 0.70710677
    %v970 = vmul.f32 %v833, 0.70710677
    %v971 = vmul.f32 %v835, 0.70710677
    %v972 = vmul.f32 %v837, 0.70710677
    %v973 = vmul.f32 %v841, 0.70710677
    %v974 = vmul.f32 %v843, 0.70710677
    %v975 = vmul.f32 %v845, 0.70710677
    %v976 = vmul.f32 %v847, 0.70710677
    %v977 = verf.f32.pop %v913
    %v978 = verf.f32.pop %v914
    %v979 = verf.f32.pop %v915
    %v980 = verf.f32.pop %v916
    %v981 = verf.f32.pop %v917
    %v982 = verf.f32.pop %v918
    %v983 = verf.f32.pop %v919
    %v984 = verf.f32.pop %v920
    %v985 = verf.f32.pop %v921
    %v986 = verf.f32.pop %v922
    %v987 = verf.f32.pop %v923
    %v988 = verf.f32.pop %v924
    %v989 = verf.f32.pop %v925
    %v990 = verf.f32.pop %v926
    %v991 = verf.f32.pop %v927
    %v992 = verf.f32.pop %v928
    %v993 = verf.f32.pop %v929
    %v994 = verf.f32.pop %v930
    %v995 = verf.f32.pop %v931
    %v996 = verf.f32.pop %v932
    %v997 = verf.f32.pop %v933
    %v998 = verf.f32.pop %v934
    %v999 = verf.f32.pop %v935
    %v1000 = verf.f32.pop %v936
    %v1001 = verf.f32.pop %v937
    %v1002 = verf.f32.pop %v938
    %v1003 = verf.f32.pop %v939
    %v1004 = verf.f32.pop %v940
    %v1005 = verf.f32.pop %v941
    %v1006 = verf.f32.pop %v942
    %v1007 = verf.f32.pop %v943
    %v1008 = verf.f32.pop %v944
    %v1009 = verf.f32.pop %v945
    %v1010 = verf.f32.pop %v946
    %v1011 = verf.f32.pop %v947
    %v1012 = verf.f32.pop %v948
    %v1013 = verf.f32.pop %v949
    %v1014 = verf.f32.pop %v950
    %v1015 = verf.f32.pop %v951
    %v1016 = verf.f32.pop %v952
    %v1017 = verf.f32.pop %v953
    %v1018 = verf.f32.pop %v954
    %v1019 = verf.f32.pop %v955
    %v1020 = verf.f32.pop %v956
    %v1021 = verf.f32.pop %v957
    %v1022 = verf.f32.pop %v958
    %v1023 = verf.f32.pop %v959
    %v1024 = verf.f32.pop %v960
    %v1025 = verf.f32.pop %v961
    %v1026 = verf.f32.pop %v962
    %v1027 = verf.f32.pop %v963
    %v1028 = verf.f32.pop %v964
    %v1029 = verf.f32.pop %v965
    %v1030 = verf.f32.pop %v966
    %v1031 = verf.f32.pop %v967
    %v1032 = verf.f32.pop %v968
    %v1033 = verf.f32.pop %v969
    %v1034 = verf.f32.pop %v970
    %v1035 = verf.f32.pop %v971
    %v1036 = verf.f32.pop %v972
    %v1037 = verf.f32.pop %v973
    %v1038 = verf.f32.pop %v974
    %v1039 = verf.f32.pop %v975
    %v1040 = verf.f32.pop %v976
    %v1041 = vadd.f32 %v977, 1.0
    %v1042 = vadd.f32 %v978, 1.0
    %v1043 = vadd.f32 %v979, 1.0
    %v1044 = vadd.f32 %v980, 1.0
    %v1045 = vadd.f32 %v981, 1.0
    %v1046 = vadd.f32 %v982, 1.0
    %v1047 = vadd.f32 %v983, 1.0
    %v1048 = vadd.f32 %v984, 1.0
    %v1049 = vadd.f32 %v985, 1.0
    %v1050 = vadd.f32 %v986, 1.0
    %v1051 = vadd.f32 %v987, 1.0
    %v1052 = vadd.f32 %v988, 1.0
    %v1053 = vadd.f32 %v989, 1.0
    %v1054 = vadd.f32 %v990, 1.0
    %v1055 = vadd.f32 %v991, 1.0
    %v1056 = vadd.f32 %v992, 1.0
    %v1057 = vadd.f32 %v993, 1.0
    %v1058 = vadd.f32 %v994, 1.0
    %v1059 = vadd.f32 %v995, 1.0
    %v1060 = vadd.f32 %v996, 1.0
    %v1061 = vadd.f32 %v997, 1.0
    %v1062 = vadd.f32 %v998, 1.0
    %v1063 = vadd.f32 %v999, 1.0
    %v1064 = vadd.f32 %v1000, 1.0
    %v1065 = vadd.f32 %v1001, 1.0
    %v1066 = vadd.f32 %v1002, 1.0
    %v1067 = vadd.f32 %v1003, 1.0
    %v1068 = vadd.f32 %v1004, 1.0
    %v1069 = vadd.f32 %v1005, 1.0
    %v1070 = vadd.f32 %v1006, 1.0
    %v1071 = vadd.f32 %v1007, 1.0
    %v1072 = vadd.f32 %v1008, 1.0
    %v1073 = vadd.f32 %v1009, 1.0
    %v1074 = vadd.f32 %v1010, 1.0
    %v1075 = vadd.f32 %v1011, 1.0
    %v1076 = vadd.f32 %v1012, 1.0
    %v1077 = vadd.f32 %v1013, 1.0
    %v1078 = vadd.f32 %v1014, 1.0
    %v1079 = vadd.f32 %v1015, 1.0
    %v1080 = vadd.f32 %v1016, 1.0
    %v1081 = vadd.f32 %v1017, 1.0
    %v1082 = vadd.f32 %v1018, 1.0
    %v1083 = vadd.f32 %v1019, 1.0
    %v1084 = vadd.f32 %v1020, 1.0
    %v1085 = vadd.f32 %v1021, 1.0
    %v1086 = vadd.f32 %v1022, 1.0
    %v1087 = vadd.f32 %v1023, 1.0
    %v1088 = vadd.f32 %v1024, 1.0
    %v1089 = vadd.f32 %v1025, 1.0
    %v1090 = vadd.f32 %v1026, 1.0
    %v1091 = vadd.f32 %v1027, 1.0
    %v1092 = vadd.f32 %v1028, 1.0
    %v1093 = vadd.f32 %v1029, 1.0
    %v1094 = vadd.f32 %v1030, 1.0
    %v1095 = vadd.f32 %v1031, 1.0
    %v1096 = vadd.f32 %v1032, 1.0
    %v1097 = vadd.f32 %v1033, 1.0
    %v1098 = vadd.f32 %v1034, 1.0
    %v1099 = vadd.f32 %v1035, 1.0
    %v1100 = vadd.f32 %v1036, 1.0
    %v1101 = vadd.f32 %v1037, 1.0
    %v1102 = vadd.f32 %v1038, 1.0
    %v1103 = vadd.f32 %v1039, 1.0
    %v1104 = vadd.f32 %v1040, 1.0
    %v1105 = vmul.f32 %v849, %v1041
    %v1106 = vmul.f32 %v850, %v1042
    %v1107 = vmul.f32 %v851, %v1043
    %v1108 = vmul.f32 %v852, %v1044
    %v1109 = vmul.f32 %v853, %v1045
    %v1110 = vmul.f32 %v854, %v1046
    %v1111 = vmul.f32 %v855, %v1047
    %v1112 = vmul.f32 %v856, %v1048
    %v1113 = vmul.f32 %v857, %v1049
    %v1114 = vmul.f32 %v858, %v1050
    %v1115 = vmul.f32 %v859, %v1051
    %v1116 = vmul.f32 %v860, %v1052
    %v1117 = vmul.f32 %v861, %v1053
    %v1118 = vmul.f32 %v862, %v1054
    %v1119 = vmul.f32 %v863, %v1055
    %v1120 = vmul.f32 %v864, %v1056
    %v1121 = vmul.f32 %v865, %v1057
    %v1122 = vmul.f32 %v866, %v1058
    %v1123 = vmul.f32 %v867, %v1059
    %v1124 = vmul.f32 %v868, %v1060
    %v1125 = vmul.f32 %v869, %v1061
    %v1126 = vmul.f32 %v870, %v1062
    %v1127 = vmul.f32 %v871, %v1063
    %v1128 = vmul.f32 %v872, %v1064
    %v1129 = vmul.f32 %v873, %v1065
    %v1130 = vmul.f32 %v874, %v1066
    %v1131 = vmul.f32 %v875, %v1067
    %v1132 = vmul.f32 %v876, %v1068
    %v1133 = vmul.f32 %v877, %v1069
    %v1134 = vmul.f32 %v878, %v1070
    %v1135 = vmul.f32 %v879, %v1071
    %v1136 = vmul.f32 %v880, %v1072
    %v1137 = vmul.f32 %v881, %v1073
    %v1138 = vmul.f32 %v882, %v1074
    %v1139 = vmul.f32 %v883, %v1075
    %v1140 = vmul.f32 %v884, %v1076
    %v1141 = vmul.f32 %v885, %v1077
    %v1142 = vmul.f32 %v886, %v1078
    %v1143 = vmul.f32 %v887, %v1079
    %v1144 = vmul.f32 %v888, %v1080
    %v1145 = vmul.f32 %v889, %v1081
    %v1146 = vmul.f32 %v890, %v1082
    %v1147 = vmul.f32 %v891, %v1083
    %v1148 = vmul.f32 %v892, %v1084
    %v1149 = vmul.f32 %v893, %v1085
    %v1150 = vmul.f32 %v894, %v1086
    %v1151 = vmul.f32 %v895, %v1087
    %v1152 = vmul.f32 %v896, %v1088
    %v1153 = vmul.f32 %v897, %v1089
    %v1154 = vmul.f32 %v898, %v1090
    %v1155 = vmul.f32 %v899, %v1091
    %v1156 = vmul.f32 %v900, %v1092
    %v1157 = vmul.f32 %v901, %v1093
    %v1158 = vmul.f32 %v902, %v1094
    %v1159 = vmul.f32 %v903, %v1095
    %v1160 = vmul.f32 %v904, %v1096
    %v1161 = vmul.f32 %v905, %v1097
    %v1162 = vmul.f32 %v906, %v1098
    %v1163 = vmul.f32 %v907, %v1099
    %v1164 = vmul.f32 %v908, %v1100
    %v1165 = vmul.f32 %v909, %v1101
    %v1166 = vmul.f32 %v910, %v1102
    %v1167 = vmul.f32 %v911, %v1103
    %v1168 = vmul.f32 %v912, %v1104
    %v1169 = vpack.c.bf16 %v1107, %v1105
    %v1170 = vpack.c.bf16 %v1108, %v1106
    %v1171 = vpack.c.bf16 %v1111, %v1109
    %v1172 = vpack.c.bf16 %v1112, %v1110
    %v1173 = vpack.c.bf16 %v1115, %v1113
    %v1174 = vpack.c.bf16 %v1116, %v1114
    %v1175 = vpack.c.bf16 %v1119, %v1117
    %v1176 = vpack.c.bf16 %v1120, %v1118
    %v1177 = vpack.c.bf16 %v1123, %v1121
    %v1178 = vpack.c.bf16 %v1124, %v1122
    %v1179 = vpack.c.bf16 %v1127, %v1125
    %v1180 = vpack.c.bf16 %v1128, %v1126
    %v1181 = vpack.c.bf16 %v1131, %v1129
    %v1182 = vpack.c.bf16 %v1132, %v1130
    %v1183 = vpack.c.bf16 %v1135, %v1133
    %v1184 = vpack.c.bf16 %v1136, %v1134
    %v1185 = vpack.c.bf16 %v1139, %v1137
    %v1186 = vpack.c.bf16 %v1140, %v1138
    %v1187 = vpack.c.bf16 %v1143, %v1141
    %v1188 = vpack.c.bf16 %v1144, %v1142
    %v1189 = vpack.c.bf16 %v1147, %v1145
    %v1190 = vpack.c.bf16 %v1148, %v1146
    %v1191 = vpack.c.bf16 %v1151, %v1149
    %v1192 = vpack.c.bf16 %v1152, %v1150
    %v1193 = vpack.c.bf16 %v1155, %v1153
    %v1194 = vpack.c.bf16 %v1156, %v1154
    %v1195 = vpack.c.bf16 %v1159, %v1157
    %v1196 = vpack.c.bf16 %v1160, %v1158
    %v1197 = vpack.c.bf16 %v1163, %v1161
    %v1198 = vpack.c.bf16 %v1164, %v1162
    %v1199 = vpack.c.bf16 %v1167, %v1165
    %v1200 = vpack.c.bf16 %v1168, %v1166
    %v1201 = vld [vmem:[#allocation7] sm:$0xf]
    %v1202 = vld [vmem:[#allocation7 + $0x4] sm:$0xf]
    %v1203 = vld [vmem:[#allocation7 + $0x8] sm:$0xf]
    %v1204 = vld [vmem:[#allocation7 + $0xc] sm:$0xf]
    %v1205 = vld [vmem:[#allocation7 + $0x10] sm:$0xf]
    %v1206 = vld [vmem:[#allocation7 + $0x14] sm:$0xf]
    %v1207 = vld [vmem:[#allocation7 + $0x18] sm:$0xf]
    %v1208 = vld [vmem:[#allocation7 + $0x1c] sm:$0xf]
    %v1209 = vld [vmem:[#allocation7 + $0x20] sm:$0xf]
    %v1210 = vld [vmem:[#allocation7 + $0x24] sm:$0xf]
    %v1211 = vld [vmem:[#allocation7 + $0x28] sm:$0xf]
    %v1212 = vld [vmem:[#allocation7 + $0x2c] sm:$0xf]
    %v1213 = vld [vmem:[#allocation7 + $0x30] sm:$0xf]
    %v1214 = vld [vmem:[#allocation7 + $0x34] sm:$0xf]
    %v1215 = vld [vmem:[#allocation7 + $0x38] sm:$0xf]
    %v1216 = vld [vmem:[#allocation7 + $0x3c] sm:$0xf]
    %v1217 = vld [vmem:[#allocation7 + $0x40] sm:$0xf]
    %v1218 = vld [vmem:[#allocation7 + $0x44] sm:$0xf]
    %v1219 = vld [vmem:[#allocation7 + $0x48] sm:$0xf]
    %v1220 = vld [vmem:[#allocation7 + $0x4c] sm:$0xf]
    %v1221 = vld [vmem:[#allocation7 + $0x50] sm:$0xf]
    %v1222 = vld [vmem:[#allocation7 + $0x54] sm:$0xf]
    %v1223 = vld [vmem:[#allocation7 + $0x58] sm:$0xf]
    %v1224 = vld [vmem:[#allocation7 + $0x5c] sm:$0xf]
    %v1225 = vld [vmem:[#allocation7 + $0x60] sm:$0xf]
    %v1226 = vld [vmem:[#allocation7 + $0x64] sm:$0xf]
    %v1227 = vld [vmem:[#allocation7 + $0x68] sm:$0xf]
    %v1228 = vld [vmem:[#allocation7 + $0x6c] sm:$0xf]
    %v1229 = vld [vmem:[#allocation7 + $0x70] sm:$0xf]
    %v1230 = vld [vmem:[#allocation7 + $0x74] sm:$0xf]
    %v1231 = vld [vmem:[#allocation7 + $0x78] sm:$0xf]
    %v1232 = vld [vmem:[#allocation7 + $0x7c] sm:$0xf]
    %v1233 = vld [vmem:[%s6] sm:$0x1]
    %v1235 = vlaneseq
    %v1236 = vshrl.u32 %v1235, 7
    %v1237 = vsub.s32 0, %v1236
    %v1238 = vrot.slane %v1233, %v1237
    %v1272 = vunpack.c.l.b16 %v1201
    %v1273 = vunpack.c.l.b16 %v1202
    %v1274 = vunpack.c.l.b16 %v1203
    %v1275 = vunpack.c.l.b16 %v1204
    %v1276 = vunpack.c.l.b16 %v1205
    %v1277 = vunpack.c.l.b16 %v1206
    %v1278 = vunpack.c.l.b16 %v1207
    %v1279 = vunpack.c.l.b16 %v1208
    %v1280 = vunpack.c.l.b16 %v1209
    %v1281 = vunpack.c.l.b16 %v1210
    %v1282 = vunpack.c.l.b16 %v1211
    %v1283 = vunpack.c.l.b16 %v1212
    %v1284 = vunpack.c.l.b16 %v1213
    %v1285 = vunpack.c.l.b16 %v1214
    %v1286 = vunpack.c.l.b16 %v1215
    %v1287 = vunpack.c.l.b16 %v1216
    %v1288 = vunpack.c.l.b16 %v1217
    %v1289 = vunpack.c.l.b16 %v1218
    %v1290 = vunpack.c.l.b16 %v1219
    %v1291 = vunpack.c.l.b16 %v1220
    %v1292 = vunpack.c.l.b16 %v1221
    %v1293 = vunpack.c.l.b16 %v1222
    %v1294 = vunpack.c.l.b16 %v1223
    %v1295 = vunpack.c.l.b16 %v1224
    %v1296 = vunpack.c.l.b16 %v1225
    %v1297 = vunpack.c.l.b16 %v1226
    %v1298 = vunpack.c.l.b16 %v1227
    %v1299 = vunpack.c.l.b16 %v1228
    %v1300 = vunpack.c.l.b16 %v1229
    %v1301 = vunpack.c.l.b16 %v1230
    %v1302 = vunpack.c.l.b16 %v1231
    %v1303 = vunpack.c.l.b16 %v1232
    %v1304 = vpack.c.b16 %v1273, %v1272
    %v1305 = vpack.c.b16 %v1275, %v1274
    %v1306 = vpack.c.b16 %v1277, %v1276
    %v1307 = vpack.c.b16 %v1279, %v1278
    %v1308 = vpack.c.b16 %v1281, %v1280
    %v1309 = vpack.c.b16 %v1283, %v1282
    %v1310 = vpack.c.b16 %v1285, %v1284
    %v1311 = vpack.c.b16 %v1287, %v1286
    %v1312 = vpack.c.b16 %v1289, %v1288
    %v1313 = vpack.c.b16 %v1291, %v1290
    %v1314 = vpack.c.b16 %v1293, %v1292
    %v1315 = vpack.c.b16 %v1295, %v1294
    %v1316 = vpack.c.b16 %v1297, %v1296
    %v1317 = vpack.c.b16 %v1299, %v1298
    %v1318 = vpack.c.b16 %v1301, %v1300
    %v1319 = vpack.c.b16 %v1303, %v1302
    %1336 = vmatprep.subr.bf16.mxu0 0
    %1337 = vmatpush1.bf16.msra.mxu0 %v1304
    %1338 = vmatprep.subr.bf16.mxu0 0
    %1339 = vmatpush1.bf16.msra.mxu0 %v1305
    %1340 = vmatprep.subr.bf16.mxu0 0
    %1341 = vmatpush1.bf16.msra.mxu0 %v1306
    %1342 = vmatprep.subr.bf16.mxu0 0
    %1343 = vmatpush1.bf16.msra.mxu0 %v1307
    %1344 = vmatprep.subr.bf16.mxu0 0
    %1345 = vmatpush1.bf16.msra.mxu0 %v1308
    %1346 = vmatprep.subr.bf16.mxu0 0
    %1347 = vmatpush1.bf16.msra.mxu0 %v1309
    %1348 = vmatprep.subr.bf16.mxu0 0
    %1349 = vmatpush1.bf16.msra.mxu0 %v1310
    %1350 = vmatprep.subr.bf16.mxu0 0
    %1351 = vmatpush1.bf16.msra.mxu0 %v1311
    %1352 = vmatprep.subr.bf16.mxu0 0
    %1353 = vmatpush1.bf16.msra.mxu0 %v1312
    %1354 = vmatprep.subr.bf16.mxu0 0
    %1355 = vmatpush1.bf16.msra.mxu0 %v1313
    %1356 = vmatprep.subr.bf16.mxu0 0
    %1357 = vmatpush1.bf16.msra.mxu0 %v1314
    %1358 = vmatprep.subr.bf16.mxu0 0
    %1359 = vmatpush1.bf16.msra.mxu0 %v1315
    %1360 = vmatprep.subr.bf16.mxu0 0
    %1361 = vmatpush1.bf16.msra.mxu0 %v1316
    %1362 = vmatprep.subr.bf16.mxu0 0
    %1363 = vmatpush1.bf16.msra.mxu0 %v1317
    %1364 = vmatprep.subr.bf16.mxu0 0
    %1365 = vmatpush1.bf16.msra.mxu0 %v1318
    %1366 = vmatprep.subr.bf16.mxu0 0
    %1367 = vmatpush1.bf16.msra.mxu0 %v1319
    %1368 = vmatprep.mubr.bf16.mxu0 %v1170
    %1369 = vmatmul.mubr.bf16.gmra.mrb[0].mxu0 %v1169
    %v1370 = vpop.f32.mrb[0].mxu0
    %v1371 = vadd.f32 %v1238, %v1370
    %v1372 = vpop.f32.mrb[0].mxu0
    %v1373 = vpop.f32.mrb[0].mxu0
    %v1374 = vadd.f32 %v1238, %v1373
    %v1375 = vpop.f32.mrb[0].mxu0
    %1376 = vmatprep.mubr.bf16.mxu0 %v1172
    %1377 = vmatmul.mubr.bf16.gmra.mrb[0].mxu0 %v1171
    %v1378 = vpop.f32.mrb[0].mxu0
    %v1379 = vadd.f32 %v1238, %v1378
    %v1380 = vpop.f32.mrb[0].mxu0
    %v1381 = vpop.f32.mrb[0].mxu0
    %v1382 = vadd.f32 %v1238, %v1381
    %v1383 = vpop.f32.mrb[0].mxu0
    %1384 = vmatprep.mubr.bf16.mxu0 %v1174
    %1385 = vmatmul.mubr.bf16.gmra.mrb[0].mxu0 %v1173
    %v1386 = vpop.f32.mrb[0].mxu0
    %v1387 = vadd.f32 %v1238, %v1386
    %v1388 = vpop.f32.mrb[0].mxu0
    %v1389 = vpop.f32.mrb[0].mxu0
    %v1390 = vadd.f32 %v1238, %v1389
    %v1391 = vpop.f32.mrb[0].mxu0
    %1392 = vmatprep.mubr.bf16.mxu0 %v1176
    %1393 = vmatmul.mubr.bf16.gmra.mrb[0].mxu0 %v1175
    %v1394 = vpop.f32.mrb[0].mxu0
    %v1395 = vadd.f32 %v1238, %v1394
    %v1396 = vpop.f32.mrb[0].mxu0
    %v1397 = vpop.f32.mrb[0].mxu0
    %v1398 = vadd.f32 %v1238, %v1397
    %v1399 = vpop.f32.mrb[0].mxu0
    %1400 = vmatprep.mubr.bf16.mxu0 %v1178
    %1401 = vmatmul.mubr.bf16.gmra.mrb[0].mxu0 %v1177
    %v1402 = vpop.f32.mrb[0].mxu0
    %v1403 = vadd.f32 %v1238, %v1402
    %v1404 = vpop.f32.mrb[0].mxu0
    %v1405 = vpop.f32.mrb[0].mxu0
    %v1406 = vadd.f32 %v1238, %v1405
    %v1407 = vpop.f32.mrb[0].mxu0
    %1408 = vmatprep.mubr.bf16.mxu0 %v1180
    %1409 = vmatmul.mubr.bf16.gmra.mrb[0].mxu0 %v1179
    %v1410 = vpop.f32.mrb[0].mxu0
    %v1411 = vadd.f32 %v1238, %v1410
    %v1412 = vpop.f32.mrb[0].mxu0
    %v1413 = vpop.f32.mrb[0].mxu0
    %v1414 = vadd.f32 %v1238, %v1413
    %v1415 = vpop.f32.mrb[0].mxu0
    %1416 = vmatprep.mubr.bf16.mxu0 %v1182
    %1417 = vmatmul.mubr.bf16.gmra.mrb[0].mxu0 %v1181
    %v1418 = vpop.f32.mrb[0].mxu0
    %v1419 = vadd.f32 %v1238, %v1418
    %v1420 = vpop.f32.mrb[0].mxu0
    %v1421 = vpop.f32.mrb[0].mxu0
    %v1422 = vadd.f32 %v1238, %v1421
    %v1423 = vpop.f32.mrb[0].mxu0
    %1424 = vmatprep.mubr.bf16.mxu0 %v1184
    %1425 = vmatmul.mubr.bf16.gmra.mrb[0].mxu0 %v1183
    %v1426 = vpop.f32.mrb[0].mxu0
    %v1427 = vadd.f32 %v1238, %v1426
    %v1428 = vpop.f32.mrb[0].mxu0
    %v1429 = vpop.f32.mrb[0].mxu0
    %v1430 = vadd.f32 %v1238, %v1429
    %v1431 = vpop.f32.mrb[0].mxu0
    %1432 = vmatprep.mubr.bf16.mxu0 %v1186
    %1433 = vmatmul.mubr.bf16.gmra.mrb[0].mxu0 %v1185
    %v1434 = vpop.f32.mrb[0].mxu0
    %v1435 = vadd.f32 %v1238, %v1434
    %v1436 = vpop.f32.mrb[0].mxu0
    %v1437 = vpop.f32.mrb[0].mxu0
    %v1438 = vadd.f32 %v1238, %v1437
    %v1439 = vpop.f32.mrb[0].mxu0
    %1440 = vmatprep.mubr.bf16.mxu0 %v1188
    %1441 = vmatmul.mubr.bf16.gmra.mrb[0].mxu0 %v1187
    %v1442 = vpop.f32.mrb[0].mxu0
    %v1443 = vadd.f32 %v1238, %v1442
    %v1444 = vpop.f32.mrb[0].mxu0
    %v1445 = vpop.f32.mrb[0].mxu0
    %v1446 = vadd.f32 %v1238, %v1445
    %v1447 = vpop.f32.mrb[0].mxu0
    %1448 = vmatprep.mubr.bf16.mxu0 %v1190
    %1449 = vmatmul.mubr.bf16.gmra.mrb[0].mxu0 %v1189
    %v1450 = vpop.f32.mrb[0].mxu0
    %v1451 = vadd.f32 %v1238, %v1450
    %v1452 = vpop.f32.mrb[0].mxu0
    %v1453 = vpop.f32.mrb[0].mxu0
    %v1454 = vadd.f32 %v1238, %v1453
    %v1455 = vpop.f32.mrb[0].mxu0
    %1456 = vmatprep.mubr.bf16.mxu0 %v1192
    %1457 = vmatmul.mubr.bf16.gmra.mrb[0].mxu0 %v1191
    %v1458 = vpop.f32.mrb[0].mxu0
    %v1459 = vadd.f32 %v1238, %v1458
    %v1460 = vpop.f32.mrb[0].mxu0
    %v1461 = vpop.f32.mrb[0].mxu0
    %v1462 = vadd.f32 %v1238, %v1461
    %v1463 = vpop.f32.mrb[0].mxu0
    %1464 = vmatprep.mubr.bf16.mxu0 %v1194
    %1465 = vmatmul.mubr.bf16.gmra.mrb[0].mxu0 %v1193
    %v1466 = vpop.f32.mrb[0].mxu0
    %v1467 = vadd.f32 %v1238, %v1466
    %v1468 = vpop.f32.mrb[0].mxu0
    %v1469 = vpop.f32.mrb[0].mxu0
    %v1470 = vadd.f32 %v1238, %v1469
    %v1471 = vpop.f32.mrb[0].mxu0
    %1472 = vmatprep.mubr.bf16.mxu0 %v1196
    %1473 = vmatmul.mubr.bf16.gmra.mrb[0].mxu0 %v1195
    %v1474 = vpop.f32.mrb[0].mxu0
    %v1475 = vadd.f32 %v1238, %v1474
    %v1476 = vpop.f32.mrb[0].mxu0
    %v1477 = vpop.f32.mrb[0].mxu0
    %v1478 = vadd.f32 %v1238, %v1477
    %v1479 = vpop.f32.mrb[0].mxu0
    %1480 = vmatprep.mubr.bf16.mxu0 %v1198
    %1481 = vmatmul.mubr.bf16.gmra.mrb[0].mxu0 %v1197
    %v1482 = vpop.f32.mrb[0].mxu0
    %v1483 = vadd.f32 %v1238, %v1482
    %v1484 = vpop.f32.mrb[0].mxu0
    %v1485 = vpop.f32.mrb[0].mxu0
    %v1486 = vadd.f32 %v1238, %v1485
    %v1487 = vpop.f32.mrb[0].mxu0
    %1488 = vmatprep.mubr.bf16.mxu0 %v1200
    %1489 = vmatmul.mubr.bf16.gmra.mrb[0].mxu0 %v1199
    %v1490 = vpop.f32.mrb[0].mxu0
    %v1491 = vadd.f32 %v1238, %v1490
    %v1492 = vpop.f32.mrb[0].mxu0
    %v1493 = vpop.f32.mrb[0].mxu0
    %v1494 = vadd.f32 %v1238, %v1493
    %v1495 = vpop.f32.mrb[0].mxu0
    %1496 = vdwg.mxu0
    %1497 = vst [vmem:[#allocation8] sm:$0xff] %v1371
    %1498 = vst [vmem:[#allocation8 + $0x8] sm:$0xff] %v1374
    %1499 = vst [vmem:[#allocation8 + $0x10] sm:$0xff] %v1379
    %1500 = vst [vmem:[#allocation8 + $0x18] sm:$0xff] %v1382
    %1501 = vst [vmem:[#allocation8 + $0x20] sm:$0xff] %v1387
    %1502 = vst [vmem:[#allocation8 + $0x28] sm:$0xff] %v1390
    %1503 = vst [vmem:[#allocation8 + $0x30] sm:$0xff] %v1395
    %1504 = vst [vmem:[#allocation8 + $0x38] sm:$0xff] %v1398
    %1505 = vst [vmem:[#allocation8 + $0x40] sm:$0xff] %v1403
    %1506 = vst [vmem:[#allocation8 + $0x48] sm:$0xff] %v1406
    %1507 = vst [vmem:[#allocation8 + $0x50] sm:$0xff] %v1411
    %1508 = vst [vmem:[#allocation8 + $0x58] sm:$0xff] %v1414
    %1509 = vst [vmem:[#allocation8 + $0x60] sm:$0xff] %v1419
    %1510 = vst [vmem:[#allocation8 + $0x68] sm:$0xff] %v1422
    %1511 = vst [vmem:[#allocation8 + $0x70] sm:$0xff] %v1427
    %1512 = vst [vmem:[#allocation8 + $0x78] sm:$0xff] %v1430
    %1513 = vst [vmem:[#allocation8 + $0x80] sm:$0xff] %v1435
    %1514 = vst [vmem:[#allocation8 + $0x88] sm:$0xff] %v1438
    %1515 = vst [vmem:[#allocation8 + $0x90] sm:$0xff] %v1443
    %1516 = vst [vmem:[#allocation8 + $0x98] sm:$0xff] %v1446
    %1517 = vst [vmem:[#allocation8 + $0xa0] sm:$0xff] %v1451
    %1518 = vst [vmem:[#allocation8 + $0xa8] sm:$0xff] %v1454
    %1519 = vst [vmem:[#allocation8 + $0xb0] sm:$0xff] %v1459
    %1520 = vst [vmem:[#allocation8 + $0xb8] sm:$0xff] %v1462
    %1521 = vst [vmem:[#allocation8 + $0xc0] sm:$0xff] %v1467
    %1522 = vst [vmem:[#allocation8 + $0xc8] sm:$0xff] %v1470
    %1523 = vst [vmem:[#allocation8 + $0xd0] sm:$0xff] %v1475
    %1524 = vst [vmem:[#allocation8 + $0xd8] sm:$0xff] %v1478
    %1525 = vst [vmem:[#allocation8 + $0xe0] sm:$0xff] %v1483
    %1526 = vst [vmem:[#allocation8 + $0xe8] sm:$0xff] %v1486
    %1527 = vst [vmem:[#allocation8 + $0xf0] sm:$0xff] %v1491
    %1528 = vst [vmem:[#allocation8 + $0xf8] sm:$0xff] %v1494
    // Predicated region
    $region42: #{tpu_custom_call.1} parent=1 // pred_check
      _
    $region43: #{tpu_custom_call.1} parent=1 // pred_check_branch
      %1530 = sbr.rel (0) target = $region45
    $region44: #{tpu_custom_call.1} parent=1 // pred_region
      %s1532 = ssub.s32 4096, 4096
      %1533 = vsyncadd [#allocation4], %s1532
      %s1534 = sshll.u32 [#allocation8], 4
      %s1535 = int_to_ptr.vmem [resolvable:$true] %s1534
      %1540 = dma.vmem_to_hbm [thread:$0]  %s1535, 4096, %s7, [#allocation4], 128, 128, 8
    $region45: #{tpu_custom_call.1} parent=1 // pred_fallthru
      _
    // Predicated region
    $region46: #{tpu_custom_call.1} parent=1 // pred_check
      _
    $region47: #{tpu_custom_call.1} parent=1 // pred_check_branch
      %1542 = sbr.rel (0) target = $region49
    $region48: #{tpu_custom_call.1} parent=1 // pred_region
      %1543 = dma.done [#allocation4], 4096
    $region49: #{tpu_custom_call.1} parent=1 // pred_fallthru
      _
    %1544 = vsyncpa [#allocation3], 1
    %1545 = vsyncpa [#allocation6], 1
    %1546 = vsyncpa [#allocation4], 1

</llo_original>
